<compile_context>
chip_gen: v7x
topology: tpu7x:2x2x1
jax: 0.10.0
libtpu: 0.0.40
codegen_flags: <defaults>
</compile_context>

<pallas_src>
import jax
import jax.numpy as jnp
from jax.experimental import pallas as pl
from jax.experimental.pallas import tpu as pltpu


def _conv_prelu_kernel(x_ref, w_ref, b_ref, a_ref, o_ref, lhs_ref):
    # x_ref:   (1, H+2, W+2, Cin) f32 zero-padded NHWC image (resident across
    #                             the row-tile axis; re-DMAed only on new n)
    # w_ref:   (9*Cin, Cout)      bf16 flattened 3x3 conv weights
    # b_ref:   (1, Cout)          f32 bias
    # a_ref:   (1, 1)             f32 PReLU alpha (SMEM scalar)
    # o_ref:   (1, tm, Cout)      bf16 conv + bias + PReLU output rows
    # lhs_ref: (tm, 9*Cin)        f32 VMEM scratch for the im2col tile
    _, hp, wp, cin = x_ref.shape
    w_out = wp - 2
    tm = o_ref.shape[1]
    th = tm // w_out
    row0 = pl.program_id(1) * th

    # In-kernel im2col: 9 shifted windows of the padded image.  Row offsets
    # index a major dim (address math only); the dx column slice is a small
    # sublane shift; the (th, W, Cin) -> (tm, Cin) merge keeps the lane dim
    # unchanged (W is a multiple of 8 for the supported shapes).
    for dy in range(3):
        rows = x_ref[0, pl.ds(row0 + dy, th), :, :]           # (th, W+2, Cin)
        for dx in range(3):
            tap = rows[:, dx:dx + w_out, :].reshape(tm, cin)  # (tm, Cin)
            k0 = (dy * 3 + dx) * cin
            lhs_ref[:, k0:k0 + cin] = tap

    # One MXU matmul per tile: bf16 inputs, f32 accumulation.
    y = jnp.dot(lhs_ref[...].astype(jnp.bfloat16), w_ref[...],
                preferred_element_type=jnp.float32)           # (tm, Cout) f32
    y = y + b_ref[...]                                        # f32 bias (VPU)
    alpha = a_ref[0, 0]
    o_ref[0] = jnp.where(y > 0, y, alpha * y).astype(o_ref.dtype)


def _pick_row_tile(H, W):
    """Image rows per grid step.

    Targets tm = th*W <= 512 output pixels per matmul (amortizes ~0.35us/step
    pipeline overhead) while keeping >= 2 row tiles per image when possible
    (megacore parallelism for small batch).  th*W must be a multiple of 8
    (or th == H) so the output BlockSpec stays legal.
    """
    divisors = [d for d in range(1, H + 1) if H % d == 0]
    ok = [d for d in divisors if (d * W) % 8 == 0 or d == H]
    cands = [d for d in ok if d * W <= 512] or ok[:1]
    th = max(cands)
    if H // th < 2:
        smaller = [d for d in cands if H // d >= 2]
        if smaller:
            th = max(smaller)
    return th


def upsampling_block(x_nchw, weight_oihw, bias, alpha, *, r=2):
    """UpsamplingBlock forward: (N, Cin, H, W) -> (N, 256 // r^2, H*r, W*r)."""
    N, Cin, H, W = x_nchw.shape
    Cout = weight_oihw.shape[0]
    K = 9 * Cin
    M = H * W
    th = _pick_row_tile(H, W)
    tm = th * W
    Hp, Wp = H + 2, W + 2

    # Only wrapper-side data prep: NCHW -> NHWC + zero pad for 'same' conv.
    # No im2col blow-up in HBM anymore.
    x_nhwc = jnp.transpose(x_nchw, (0, 2, 3, 1))
    x_pad = jnp.pad(x_nhwc, ((0, 0), (1, 1), (1, 1), (0, 0)))

    # weights OIHW -> (ky, kx, cin, cout) -> (9*Cin, Cout), bf16 for the MXU.
    w_mat = jnp.transpose(weight_oihw, (2, 3, 1, 0)).reshape(K, Cout)
    w_mat = w_mat.astype(jnp.bfloat16)
    b2 = bias.reshape(1, Cout).astype(jnp.float32)
    a2 = jnp.asarray(alpha, jnp.float32).reshape(1, 1)

    # Conv + bias + PReLU: one MXU matmul per row tile, bf16 output.
    y = pl.pallas_call(
        _conv_prelu_kernel,
        out_shape=jax.ShapeDtypeStruct((N, M, Cout), jnp.bfloat16),
        grid_spec=pltpu.PrefetchScalarGridSpec(
            num_scalar_prefetch=0,
            grid=(N, H // th),
            in_specs=[
                pl.BlockSpec((1, Hp, Wp, Cin), lambda n, m: (n, 0, 0, 0)),
                pl.BlockSpec((K, Cout), lambda n, m: (0, 0)),
                pl.BlockSpec((1, Cout), lambda n, m: (0, 0)),
                pl.BlockSpec(memory_space=pltpu.MemorySpace.SMEM),
            ],
            out_specs=pl.BlockSpec((1, tm, Cout), lambda n, m: (n, m, 0)),
            scratch_shapes=[pltpu.VMEM((tm, K), jnp.float32)],
        ),
        compiler_params=pltpu.CompilerParams(
            dimension_semantics=("parallel", "parallel")),
    )(x_pad, w_mat, b2, a2)

    # PixelShuffle(r) with PyTorch semantics + NHWC -> NCHW: one fused XLA
    # transpose on the output side, reading bf16.
    C2 = Cout // (r * r)
    y = y.reshape(N, H, W, C2, r, r)
    y = jnp.transpose(y, (0, 3, 1, 4, 2, 5))                  # N, C2, H, r, W, r
    return y.reshape(N, C2, H * r, W * r).astype(x_nchw.dtype)


def _reference(x, weight, bias, alpha, r=2):
    """Pure-JAX f32 reference matching the PyTorch module."""
    y = jax.lax.conv_general_dilated(
        x, weight, window_strides=(1, 1), padding='SAME',
        dimension_numbers=('NCHW', 'OIHW', 'NCHW'))
    y = y + bias.reshape(1, -1, 1, 1)
    N, C, H, W = y.shape
    C2 = C // (r * r)
    y = y.reshape(N, C2, r, r, H, W)
    y = jnp.transpose(y, (0, 1, 4, 2, 5, 3)).reshape(N, C2, H * r, W * r)
    return jnp.where(y > 0, y, alpha * y)


if __name__ == "__main__":
    key = jax.random.PRNGKey(0)
    k_x, k_w, k_b = jax.random.split(key, 3)

    N, Cin, H, W = 2, 4, 16, 16
    Cout = 256  # fixed by the module

    x = jax.random.normal(k_x, (N, Cin, H, W), dtype=jnp.float32)
    # Deterministic synthetic parameters (not a checkpoint load).
    weight = jax.random.normal(k_w, (Cout, Cin, 3, 3), dtype=jnp.float32) * 0.05
    bias = jax.random.normal(k_b, (Cout,), dtype=jnp.float32) * 0.05
    alpha = jnp.float32(0.25)  # nn.PReLU default init

    fwd = jax.jit(upsampling_block)
    out = fwd(x, weight, bias, alpha)
    out = jax.block_until_ready(out)

    ref = _reference(x, weight, bias, alpha)
    assert out.shape == (N, Cout // 4, H * 2, W * 2), out.shape
    # bf16 matmul inputs + bf16 kernel output with f32 accumulation.
    max_err = float(jnp.max(jnp.abs(out - ref)))
    assert jnp.allclose(out, ref, rtol=2e-2, atol=2e-2), f"mismatch, max_err={max_err}"

    print("KERNEL_OK")
</pallas_src>

<mosaic_0001>
module attributes {stable_mosaic.version = 11 : i64} {
  func.func @_conv_prelu_kernel(%arg0: i32, %arg1: i32, %arg2: memref<1x18x18x4xf32, #tpu.memory_space<vmem>>, %arg3: memref<36x256xbf16, #tpu.memory_space<vmem>>, %arg4: memref<1x256xf32, #tpu.memory_space<vmem>>, %arg5: memref<1x1xf32, #tpu.memory_space<smem>>, %arg6: memref<1x128x256xbf16, #tpu.memory_space<vmem>>, %arg7: memref<128x36xf32, #tpu.memory_space<vmem>>) attributes {dimension_semantics = [#tpu.dimension_semantics<parallel>, #tpu.dimension_semantics<parallel>], iteration_bounds = array<i64: 2, 2>, scalar_prefetch = 0 : i64, scratch_operands = 1 : i64, tpu.core_type = #tpu.core_type<tc>, window_params = [{transform_indices = @transform_0, window_bounds = array<i64: 1, 18, 18, 4>}, {pipeline_mode = #tpu.pipeline_mode<synchronous>, transform_indices = @transform_1, window_bounds = array<i64: 36, 256>}, {pipeline_mode = #tpu.pipeline_mode<synchronous>, transform_indices = @transform_2, window_bounds = array<i64: 1, 256>}, {transform_indices = @transform_3, window_bounds = array<i64: 1, 1>}, {transform_indices = @transform_4, window_bounds = array<i64: 1, 128, 256>}]} {
    %c8_i32 = arith.constant 8 : i32
    %0 = arith.muli %arg1, %c8_i32 : i32
    %c0_i32 = arith.constant 0 : i32
    %1 = arith.addi %0, %c0_i32 : i32
    %c0 = arith.constant 0 : index
    %2 = arith.index_cast %1 : i32 to index
    %c0_0 = arith.constant 0 : index
    %c0_1 = arith.constant 0 : index
    %3 = vector.load %arg2[%c0, %2, %c0_0, %c0_1] : memref<1x18x18x4xf32, #tpu.memory_space<vmem>>, vector<1x8x18x4xf32>
    %4 = vector.shape_cast %3 : vector<1x8x18x4xf32> to vector<8x18x4xf32>
    %5 = vector.extract_strided_slice %4 {offsets = [0, 0, 0], sizes = [8, 16, 4], strides = [1, 1, 1]} : vector<8x18x4xf32> to vector<8x16x4xf32>
    %6 = vector.shape_cast %5 : vector<8x16x4xf32> to vector<128x4xf32>
    %c0_2 = arith.constant 0 : index
    %c0_3 = arith.constant 0 : index
    %7 = vector.load %arg7[%c0_2, %c0_3] : memref<128x36xf32, #tpu.memory_space<vmem>>, vector<128x4xf32>
    tpu.vector_store %arg7[%c0_2, %c0_3], %6 {strides = array<i32>} : memref<128x36xf32, #tpu.memory_space<vmem>>, vector<128x4xf32>,
    %8 = vector.extract_strided_slice %4 {offsets = [0, 1, 0], sizes = [8, 16, 4], strides = [1, 1, 1]} : vector<8x18x4xf32> to vector<8x16x4xf32>
    %9 = vector.shape_cast %8 : vector<8x16x4xf32> to vector<128x4xf32>
    %c0_4 = arith.constant 0 : index
    %c4 = arith.constant 4 : index
    %10 = vector.load %arg7[%c0_4, %c4] : memref<128x36xf32, #tpu.memory_space<vmem>>, vector<128x4xf32>
    tpu.vector_store %arg7[%c0_4, %c4], %9 {strides = array<i32>} : memref<128x36xf32, #tpu.memory_space<vmem>>, vector<128x4xf32>,
    %11 = vector.extract_strided_slice %4 {offsets = [0, 2, 0], sizes = [8, 16, 4], strides = [1, 1, 1]} : vector<8x18x4xf32> to vector<8x16x4xf32>
    %12 = vector.shape_cast %11 : vector<8x16x4xf32> to vector<128x4xf32>
    %c0_5 = arith.constant 0 : index
    %c8 = arith.constant 8 : index
    %13 = vector.load %arg7[%c0_5, %c8] : memref<128x36xf32, #tpu.memory_space<vmem>>, vector<128x4xf32>
    tpu.vector_store %arg7[%c0_5, %c8], %12 {strides = array<i32>} : memref<128x36xf32, #tpu.memory_space<vmem>>, vector<128x4xf32>,
    %c1_i32 = arith.constant 1 : i32
    %14 = arith.addi %0, %c1_i32 : i32
    %c0_6 = arith.constant 0 : index
    %15 = arith.index_cast %14 : i32 to index
    %c0_7 = arith.constant 0 : index
    %c0_8 = arith.constant 0 : index
    %16 = vector.load %arg2[%c0_6, %15, %c0_7, %c0_8] : memref<1x18x18x4xf32, #tpu.memory_space<vmem>>, vector<1x8x18x4xf32>
    %17 = vector.shape_cast %16 : vector<1x8x18x4xf32> to vector<8x18x4xf32>
    %18 = vector.extract_strided_slice %17 {offsets = [0, 0, 0], sizes = [8, 16, 4], strides = [1, 1, 1]} : vector<8x18x4xf32> to vector<8x16x4xf32>
    %19 = vector.shape_cast %18 : vector<8x16x4xf32> to vector<128x4xf32>
    %c0_9 = arith.constant 0 : index
    %c12 = arith.constant 12 : index
    %20 = vector.load %arg7[%c0_9, %c12] : memref<128x36xf32, #tpu.memory_space<vmem>>, vector<128x4xf32>
    tpu.vector_store %arg7[%c0_9, %c12], %19 {strides = array<i32>} : memref<128x36xf32, #tpu.memory_space<vmem>>, vector<128x4xf32>,
    %21 = vector.extract_strided_slice %17 {offsets = [0, 1, 0], sizes = [8, 16, 4], strides = [1, 1, 1]} : vector<8x18x4xf32> to vector<8x16x4xf32>
    %22 = vector.shape_cast %21 : vector<8x16x4xf32> to vector<128x4xf32>
    %c0_10 = arith.constant 0 : index
    %c16 = arith.constant 16 : index
    %23 = vector.load %arg7[%c0_10, %c16] : memref<128x36xf32, #tpu.memory_space<vmem>>, vector<128x4xf32>
    tpu.vector_store %arg7[%c0_10, %c16], %22 {strides = array<i32>} : memref<128x36xf32, #tpu.memory_space<vmem>>, vector<128x4xf32>,
    %24 = vector.extract_strided_slice %17 {offsets = [0, 2, 0], sizes = [8, 16, 4], strides = [1, 1, 1]} : vector<8x18x4xf32> to vector<8x16x4xf32>
    %25 = vector.shape_cast %24 : vector<8x16x4xf32> to vector<128x4xf32>
    %c0_11 = arith.constant 0 : index
    %c20 = arith.constant 20 : index
    %26 = vector.load %arg7[%c0_11, %c20] : memref<128x36xf32, #tpu.memory_space<vmem>>, vector<128x4xf32>
    tpu.vector_store %arg7[%c0_11, %c20], %25 {strides = array<i32>} : memref<128x36xf32, #tpu.memory_space<vmem>>, vector<128x4xf32>,
    %c2_i32 = arith.constant 2 : i32
    %27 = arith.addi %0, %c2_i32 : i32
    %c0_12 = arith.constant 0 : index
    %28 = arith.index_cast %27 : i32 to index
    %c0_13 = arith.constant 0 : index
    %c0_14 = arith.constant 0 : index
    %29 = vector.load %arg2[%c0_12, %28, %c0_13, %c0_14] : memref<1x18x18x4xf32, #tpu.memory_space<vmem>>, vector<1x8x18x4xf32>
    %30 = vector.shape_cast %29 : vector<1x8x18x4xf32> to vector<8x18x4xf32>
    %31 = vector.extract_strided_slice %30 {offsets = [0, 0, 0], sizes = [8, 16, 4], strides = [1, 1, 1]} : vector<8x18x4xf32> to vector<8x16x4xf32>
    %32 = vector.shape_cast %31 : vector<8x16x4xf32> to vector<128x4xf32>
    %c0_15 = arith.constant 0 : index
    %c24 = arith.constant 24 : index
    %33 = vector.load %arg7[%c0_15, %c24] : memref<128x36xf32, #tpu.memory_space<vmem>>, vector<128x4xf32>
    tpu.vector_store %arg7[%c0_15, %c24], %32 {strides = array<i32>} : memref<128x36xf32, #tpu.memory_space<vmem>>, vector<128x4xf32>,
    %34 = vector.extract_strided_slice %30 {offsets = [0, 1, 0], sizes = [8, 16, 4], strides = [1, 1, 1]} : vector<8x18x4xf32> to vector<8x16x4xf32>
    %35 = vector.shape_cast %34 : vector<8x16x4xf32> to vector<128x4xf32>
    %c0_16 = arith.constant 0 : index
    %c28 = arith.constant 28 : index
    %36 = vector.load %arg7[%c0_16, %c28] : memref<128x36xf32, #tpu.memory_space<vmem>>, vector<128x4xf32>
    tpu.vector_store %arg7[%c0_16, %c28], %35 {strides = array<i32>} : memref<128x36xf32, #tpu.memory_space<vmem>>, vector<128x4xf32>,
    %37 = vector.extract_strided_slice %30 {offsets = [0, 2, 0], sizes = [8, 16, 4], strides = [1, 1, 1]} : vector<8x18x4xf32> to vector<8x16x4xf32>
    %38 = vector.shape_cast %37 : vector<8x16x4xf32> to vector<128x4xf32>
    %c0_17 = arith.constant 0 : index
    %c32 = arith.constant 32 : index
    %39 = vector.load %arg7[%c0_17, %c32] : memref<128x36xf32, #tpu.memory_space<vmem>>, vector<128x4xf32>
    tpu.vector_store %arg7[%c0_17, %c32], %38 {strides = array<i32>} : memref<128x36xf32, #tpu.memory_space<vmem>>, vector<128x4xf32>,
    %c0_18 = arith.constant 0 : index
    %c0_19 = arith.constant 0 : index
    %40 = vector.load %arg7[%c0_18, %c0_19] : memref<128x36xf32, #tpu.memory_space<vmem>>, vector<128x36xf32>
    %41 = arith.truncf %40 : vector<128x36xf32> to vector<128x36xbf16>
    %c0_20 = arith.constant 0 : index
    %c0_21 = arith.constant 0 : index
    %42 = vector.load %arg3[%c0_20, %c0_21] : memref<36x256xbf16, #tpu.memory_space<vmem>>, vector<36x256xbf16>
    %cst = arith.constant dense<0.000000e+00> : vector<128x256xf32>
    %43 = tpu.matmul %41, %42, %cst {dimension_numbers = #tpu.dot_dimension_numbers<[1], [0], [0], [1], [0, 0, 1, 1], [], []>} : vector<128x36xbf16>, vector<36x256xbf16>, vector<128x256xf32> -> vector<128x256xf32>
    %c0_22 = arith.constant 0 : index
    %c0_23 = arith.constant 0 : index
    %44 = vector.load %arg4[%c0_22, %c0_23] : memref<1x256xf32, #tpu.memory_space<vmem>>, vector<1x256xf32>
    %45 = vector.broadcast %44 : vector<1x256xf32> to vector<128x256xf32>
    %46 = arith.addf %43, %45 : vector<128x256xf32>
    %c0_24 = arith.constant 0 : index
    %c0_25 = arith.constant 0 : index
    %47 = memref.load %arg5[%c0_24, %c0_25] : memref<1x1xf32, #tpu.memory_space<smem>>
    %cst_26 = arith.constant 0.000000e+00 : f32
    %48 = vector.broadcast %cst_26 : f32 to vector<128x256xf32>
    %49 = arith.cmpf ogt, %46, %48 : vector<128x256xf32>
    %50 = vector.broadcast %47 : f32 to vector<128x256xf32>
    %51 = arith.mulf %50, %46 : vector<128x256xf32>
    %52 = arith.select %49, %46, %51 : vector<128x256xi1>, vector<128x256xf32>
    %53 = arith.truncf %52 : vector<128x256xf32> to vector<128x256xbf16>
    %c0_27 = arith.constant 0 : index
    %c0_28 = arith.constant 0 : index
    %c0_29 = arith.constant 0 : index
    %54 = vector.load %arg6[%c0_27, %c0_28, %c0_29] : memref<1x128x256xbf16, #tpu.memory_space<vmem>>, vector<1x128x256xbf16>
    %55 = vector.shape_cast %54 : vector<1x128x256xbf16> to vector<128x256xbf16>
    %56 = vector.shape_cast %53 : vector<128x256xbf16> to vector<1x128x256xbf16>
    tpu.vector_store %arg6[%c0_27, %c0_28, %c0_29], %56 {strides = array<i32>} : memref<1x128x256xbf16, #tpu.memory_space<vmem>>, vector<1x128x256xbf16>,
    return
  }
  func.func @transform_0(%arg0: i32, %arg1: i32) -> (i32, i32, i32, i32) {
    %c0_i32 = arith.constant 0 : i32
    %c0_i32_0 = arith.constant 0 : i32
    %c0_i32_1 = arith.constant 0 : i32
    %c0_i32_2 = arith.constant 0 : i32
    return %arg0, %c0_i32, %c0_i32_0, %c0_i32_1 : i32, i32, i32, i32
  }
  func.func @transform_1(%arg0: i32, %arg1: i32) -> (i32, i32) {
    %c0_i32 = arith.constant 0 : i32
    %c0_i32_0 = arith.constant 0 : i32
    %c0_i32_1 = arith.constant 0 : i32
    return %c0_i32, %c0_i32_0 : i32, i32
  }
  func.func @transform_2(%arg0: i32, %arg1: i32) -> (i32, i32) {
    %c0_i32 = arith.constant 0 : i32
    %c0_i32_0 = arith.constant 0 : i32
    %c0_i32_1 = arith.constant 0 : i32
    return %c0_i32, %c0_i32_0 : i32, i32
  }
  func.func @transform_3(%arg0: i32, %arg1: i32) -> (i32, i32) {
    %c0_i32 = arith.constant 0 : i32
    %c0_i32_0 = arith.constant 0 : i32
    %c0_i32_1 = arith.constant 0 : i32
    return %c0_i32, %c0_i32_0 : i32, i32
  }
  func.func @transform_4(%arg0: i32, %arg1: i32) -> (i32, i32, i32) {
    %c0_i32 = arith.constant 0 : i32
    %c0_i32_0 = arith.constant 0 : i32
    return %arg0, %arg1, %c0_i32 : i32, i32, i32
  }
}

</mosaic_0001>

<llo_original>
// kernel: upsampling_block.1
$region0: #{upsampling_block.1}
  #allocation0 [shape = 'u32[]', space=smem, size = 0x4, offset = 0x4, fixed_abs, tag = 'smem constant byte address 0x4 - core index']
  #allocation1 [shape = 'u32[144,128]{1,0:T(1,128)}', space=vmem, size = 0x12000, scoped, tag = 'internal scratch']
  #allocation2 [shape = 'f32[128,36]{1,0:T(8,128)}', space=vmem, size = 0x10000, scoped, tag = 'scratch operand']
  #allocation3 [shape = 'f32[1,1]{1,0:T(1,128)S(6)}', space=smem, size = 0x200, scoped, tag = 'scoped memory for upsampling_block.1']
  %s0 = inlined_call_operand.vmem [shape: f32[2,18,18,4], index: 0, kind: input, shape index: {}]
  %s1 = inlined_call_operand.vmem [shape: bf16[36,256], index: 1, kind: input, shape index: {}]
  %s2 = inlined_call_operand.hbm [shape: f32[1,256], index: 2, kind: input, shape index: {}]
  %s3 = inlined_call_operand.<no memory space> [shape: f32[1,1], index: 3, kind: input, shape index: {}]
  %s4 = inlined_call_operand.vmem [shape: bf16[2,256,256], index: 4, kind: output, shape index: {}]
  %s5 = sld [smem:[#allocation0]]
  $region53: #{upsampling_block.1} parent=0
    _
  %s7 = ssub.s32 1, %s5
  %s8 = scalar_select 0, %s7, %s5
  %9 = sst [smem:[#allocation3]] %s3
  $region1: #{upsampling_block.1} parent=0
    #allocation4 [shape = 'u8[1024]{0}', space=vmem, size = 0x400, scoped, tag = 'input window, operand 2, single buffered']
    #allocation5 [shape = 's32[2]{0}', space=sflag, size = 0x8, scoped, tag = 'scoped memory for upsampling_block.1']
    %10 = vsyncpa [#allocation5], 0
    loop: start=0, step=1, limit=6
    $region2: #{upsampling_block.1} parent=1 // loop_pre_header
      _
    $region3: #{upsampling_block.1} parent=1 // loop_header
      %s12 = sphi 0, %s16
      %p13 = scmp.ge.s32.totalorder %s12, 6
      %s19 = sphi 0, %s31
      %s20 = sphi 0, %s27
      %s21 = sphi 0, %s19
      %s22 = sphi 0, %s20
      %s23 = sphi 0, %s21
      %s24 = sphi 0, %s22
      %s34 = sphi 0, %s36
      %s37 = sphi 0, %s34
      %s38 = sphi 0, %s37
      %s54 = sphi 0, %s38
      %s58 = sphi 0, %s58
      %s60 = sphi 0, %s58
      %s61 = sphi 0, %s60
      %s75 = sphi 0, %s61
      %s79 = sphi 0, %s79
      %s81 = sphi 0, %s79
      %s82 = sphi 0, %s81
      %s96 = sphi 0, %s82
      %s100 = sphi 0, %s100
      %s102 = sphi 0, %s100
      %s103 = sphi 0, %s102
      %s117 = sphi 0, %s103
      %s125 = sphi 0, %s127
      %s128 = sphi 0, %s125
      %s129 = sphi 0, %s128
      %s145 = sphi 0, %s129
    $region4: #{upsampling_block.1} parent=1 // loop_header_branch
      %15 = sbr.rel (%p13) target = $region8
    $region5: #{upsampling_block.1} parent=1 // loop_body
      %s17 = ssub.s32 %s12, 1
      %s18 = ssub.s32 %s12, 2
      %s25 = sadd.s32 1, %s20
      %p26 = scmp.ge.s32.totalorder %s25, 2
      %s27 = scalar_select %p26, 0, %s25
      %s28 = sadd.s32 1, %s19
      %s29 = scalar_select %p26, %s28, %s19
      %p30 = scmp.ge.s32.totalorder %s29, 2
      %s31 = scalar_select %p30, 0, %s29
      %s32 = ssub.s32 %s19, %s31
      %p33 = scmp.eq.s32.totalorder %s32, 0
      %s35 = sadd.s32 %s34, 1
      %s36 = scalar_select %p33, %s34, %s35
      %p39 = pneg %p33
      %p40 = scmp.eq.s32.totalorder %s12, 3
      %p41 = por %p39, %p40
      %p42 = scmp.ne.s32.totalorder %s34, %s37
      %p43 = scmp.eq.s32.totalorder %s12, 0
      %p44 = por %p42, %p43
      %p45 = scmp.ne.s32.totalorder %s34, %s37
      %p46 = scmp.eq.s32.totalorder %s17, 3
      %p47 = por %p45, %p46
      %p48 = scmp.ne.s32.totalorder %s37, %s38
      %p49 = scmp.eq.s32.totalorder %s17, 0
      %p50 = por %p48, %p49
      %p51 = scmp.ne.s32.totalorder %s37, %s38
      %p52 = scmp.eq.s32.totalorder %s18, 3
      %p53 = por %p51, %p52
      %p55 = scmp.ne.s32.totalorder %s38, %s54
      %p56 = scmp.eq.s32.totalorder %s18, 0
      %p57 = por %p55, %p56
      %s59 = sadd.s32 %s58, 1
      %p62 = scmp.eq.s32.totalorder %s12, 3
      %p63 = scmp.ne.s32.totalorder %s58, %s60
      %p64 = scmp.eq.s32.totalorder %s12, 0
      %p65 = por %p63, %p64
      %p66 = scmp.ne.s32.totalorder %s58, %s60
      %p67 = scmp.eq.s32.totalorder %s17, 3
      %p68 = por %p66, %p67
      %p69 = scmp.ne.s32.totalorder %s60, %s61
      %p70 = scmp.eq.s32.totalorder %s17, 0
      %p71 = por %p69, %p70
      %p72 = scmp.ne.s32.totalorder %s60, %s61
      %p73 = scmp.eq.s32.totalorder %s18, 3
      %p74 = por %p72, %p73
      %p76 = scmp.ne.s32.totalorder %s61, %s75
      %p77 = scmp.eq.s32.totalorder %s18, 0
      %p78 = por %p76, %p77
      %s80 = sadd.s32 %s79, 1
      %p83 = scmp.eq.s32.totalorder %s12, 3
      %p84 = scmp.ne.s32.totalorder %s79, %s81
      %p85 = scmp.eq.s32.totalorder %s12, 0
      %p86 = por %p84, %p85
      %p87 = scmp.ne.s32.totalorder %s79, %s81
      %p88 = scmp.eq.s32.totalorder %s17, 3
      %p89 = por %p87, %p88
      %p90 = scmp.ne.s32.totalorder %s81, %s82
      %p91 = scmp.eq.s32.totalorder %s17, 0
      %p92 = por %p90, %p91
      %p93 = scmp.ne.s32.totalorder %s81, %s82
      %p94 = scmp.eq.s32.totalorder %s18, 3
      %p95 = por %p93, %p94
      %p97 = scmp.ne.s32.totalorder %s82, %s96
      %p98 = scmp.eq.s32.totalorder %s18, 0
      %p99 = por %p97, %p98
      %s101 = sadd.s32 %s100, 1
      %p104 = scmp.eq.s32.totalorder %s12, 3
      %p105 = scmp.ne.s32.totalorder %s100, %s102
      %p106 = scmp.eq.s32.totalorder %s12, 0
      %p107 = por %p105, %p106
      %p108 = scmp.ne.s32.totalorder %s100, %s102
      %p109 = scmp.eq.s32.totalorder %s17, 3
      %p110 = por %p108, %p109
      %p111 = scmp.ne.s32.totalorder %s102, %s103
      %p112 = scmp.eq.s32.totalorder %s17, 0
      %p113 = por %p111, %p112
      %p114 = scmp.ne.s32.totalorder %s102, %s103
      %p115 = scmp.eq.s32.totalorder %s18, 3
      %p116 = por %p114, %p115
      %p118 = scmp.ne.s32.totalorder %s103, %s117
      %p119 = scmp.eq.s32.totalorder %s18, 0
      %p120 = por %p118, %p119
      %s121 = ssub.s32 %s19, %s31
      %s122 = ssub.s32 %s20, %s27
      %s123 = sor.u32 %s121, %s122
      %p124 = scmp.eq.s32.totalorder %s123, 0
      %s126 = sadd.s32 %s125, 1
      %s127 = scalar_select %p124, %s125, %s126
      %p130 = pneg %p124
      %p131 = scmp.eq.s32.totalorder %s12, 3
      %p132 = por %p130, %p131
      %p133 = scmp.ne.s32.totalorder %s125, %s128
      %p134 = scmp.eq.s32.totalorder %s12, 0
      %p135 = por %p133, %p134
      %p136 = scmp.ne.s32.totalorder %s125, %s128
      %p137 = scmp.eq.s32.totalorder %s17, 3
      %p138 = por %p136, %p137
      %p139 = scmp.ne.s32.totalorder %s128, %s129
      %p140 = scmp.eq.s32.totalorder %s17, 0
      %p141 = por %p139, %p140
      %p142 = scmp.ne.s32.totalorder %s128, %s129
      %p143 = scmp.eq.s32.totalorder %s18, 3
      %p144 = por %p142, %p143
      %p146 = scmp.ne.s32.totalorder %s129, %s145
      %p147 = scmp.eq.s32.totalorder %s18, 0
      %p148 = por %p146, %p147
      %p149 = scmp.le.s32.totalorder 1, %s12
      %p150 = scmp.lt.s32.totalorder %s12, 5
      %p151 = pnand %p149, %p150
      %p152 = pneg %p151
      // Predicated region
      $region9: #{upsampling_block.1} parent=5 // pred_check
        _
      $region10: #{upsampling_block.1} parent=5 // pred_check_branch
        %154 = sbr.rel (%p151) target = $region12
      $region11: #{upsampling_block.1} parent=5 // pred_region
        %s155 = ssub.s32 %s12, 1
        // Predicated region
        $region13: #{upsampling_block.1} parent=11 // pred_check
          %p156 = pneg %p71
        $region14: #{upsampling_block.1} parent=11 // pred_check_branch
          %158 = sbr.rel (%p156) target = $region16
        $region15: #{upsampling_block.1} parent=11 // pred_region
          _
        $region16: #{upsampling_block.1} parent=11 // pred_fallthru
          _
        // Predicated region
        $region17: #{upsampling_block.1} parent=11 // pred_check
          %p159 = pneg %p92
        $region18: #{upsampling_block.1} parent=11 // pred_check_branch
          %161 = sbr.rel (%p159) target = $region20
        $region19: #{upsampling_block.1} parent=11 // pred_region
          %s163 = ssub.s32 32, 32
          %164 = vsyncadd [#allocation5], %s163
          %s166 = sshll.u32 [#allocation4], 4
          %s167 = int_to_ptr.vmem [resolvable:$true] %s166
          %169 = dma.hbm_to_vmem [thread:$0]  %s2, 32, %s167, [#allocation5]
        $region20: #{upsampling_block.1} parent=11 // pred_fallthru
          _
        // Predicated region
        $region21: #{upsampling_block.1} parent=11 // pred_check
          %p170 = pneg %p113
        $region22: #{upsampling_block.1} parent=11 // pred_check_branch
          %172 = sbr.rel (%p170) target = $region24
        $region23: #{upsampling_block.1} parent=11 // pred_region
          _
        $region24: #{upsampling_block.1} parent=11 // pred_fallthru
          _
      $region12: #{upsampling_block.1} parent=5 // pred_fallthru
        _
      %p173 = scmp.lt.s32.totalorder %s12, 4
      // Predicated region
      $region25: #{upsampling_block.1} parent=5 // pred_check
        %p174 = pneg %p173
      $region26: #{upsampling_block.1} parent=5 // pred_check_branch
        %176 = sbr.rel (%p174) target = $region28
      $region27: #{upsampling_block.1} parent=5 // pred_region
        // Predicated region
        $region29: #{upsampling_block.1} parent=27 // pred_check
          %p177 = pneg %p44
        $region30: #{upsampling_block.1} parent=27 // pred_check_branch
          %179 = sbr.rel (%p177) target = $region32
        $region31: #{upsampling_block.1} parent=27 // pred_region
          %p180 = scmp.lt.s32.totalorder %s19, 1
          %s181 = scalar_select %p180, %s19, 1
          %s182 = smul.addr %s181, 54
          %s183 = smul.addr %s182, 8
          %s184 = scalar_lea.vmem %s0, %s183
        $region32: #{upsampling_block.1} parent=27 // pred_fallthru
          _
      $region28: #{upsampling_block.1} parent=5 // pred_fallthru
        _
      %p185 = scmp.le.s32.totalorder 1, %s12
      %p186 = scmp.lt.s32.totalorder %s12, 5
      %p187 = pnand %p185, %p186
      %p188 = pneg %p187
      // Predicated region
      $region33: #{upsampling_block.1} parent=5 // pred_check
        _
      $region34: #{upsampling_block.1} parent=5 // pred_check_branch
        %190 = sbr.rel (%p187) target = $region36
      $region35: #{upsampling_block.1} parent=5 // pred_region
        %s191 = ssub.s32 %s12, 1
        // Predicated region
        $region37: #{upsampling_block.1} parent=35 // pred_check
          %p192 = pneg %p92
        $region38: #{upsampling_block.1} parent=35 // pred_check_branch
          %194 = sbr.rel (%p192) target = $region40
        $region39: #{upsampling_block.1} parent=35 // pred_region
          %195 = dma.done [#allocation5], 32
        $region40: #{upsampling_block.1} parent=35 // pred_fallthru
          _
        %p196 = scmp.lt.s32.totalorder %s21, 1
        %s197 = scalar_select %p196, %s21, 1
        %s198 = smul.addr %s197, 54
        %s199 = smul.addr %s198, 8
        %s200 = scalar_lea.vmem %s0, %s199
        %p201 = pneg %p50
        %p202 = pneg %p47
        %p203 = pneg %p71
        %p204 = pneg %p68
        %p205 = pneg %p92
        %p206 = pneg %p89
        %p207 = pneg %p113
        %p208 = pneg %p110
        %p209 = pneg %p141
        %p210 = pneg %p138
        %s211 = smul.u32 16, %s22
        %p212 = scmp.lt.s32.totalorder %s21, 1
        %s213 = scalar_select %p212, %s21, 1
        %p214 = scmp.lt.s32.totalorder %s211, 31
        %s215 = scalar_select %p214, %s211, 31
        %s216 = smul.addr %s215, 2
        %s217 = smul.addr %s213, 64
        %s218 = sadd.s32 %s216, %s217
        %s219 = smul.addr %s218, 4
        %s220 = scalar_lea.vmem %s4, %s219
        %p221 = scmp.lt.s32.totalorder %s21, 1
        %s222 = scalar_select %p221, %s21, 1
        %s223 = smul.addr %s222, 54
        %s224 = smul.addr %s223, 8
        %s225 = scalar_lea.vmem %s0, %s224
        %s226 = smul.u32 16, %s22
        %p227 = scmp.lt.s32.totalorder %s21, 1
        %s228 = scalar_select %p227, %s21, 1
        %p229 = scmp.lt.s32.totalorder %s226, 31
        %s230 = scalar_select %p229, %s226, 31
        %s231 = smul.addr %s230, 2
        %s232 = smul.addr %s228, 64
        %s233 = sadd.s32 %s231, %s232
        %s234 = smul.addr %s233, 4
        %s235 = scalar_lea.vmem %s4, %s234
        %s236 = smul.u32 16, %s22
        %s238 = smul.u32 %s22, 8
        %s239 = smul.u32 %s238, 24
        %s240 = scalar_lea.vmem %s225, %s239
        %v241 = vld [vmem:[%s240] sm:$0xff]
        %v242 = vld [vmem:[%s240 + $0x8] sm:$0xff]
        %v243 = vld [vmem:[%s240 + $0x10] sm:$0x3]
        %v244 = vld [vmem:[%s240 + $0x18] sm:$0xff]
        %v245 = vld [vmem:[%s240 + $0x20] sm:$0xff]
        %v246 = vld [vmem:[%s240 + $0x28] sm:$0x3]
        %v247 = vld [vmem:[%s240 + $0x30] sm:$0xff]
        %v248 = vld [vmem:[%s240 + $0x38] sm:$0xff]
        %v249 = vld [vmem:[%s240 + $0x40] sm:$0x3]
        %v250 = vld [vmem:[%s240 + $0x48] sm:$0xff]
        %v251 = vld [vmem:[%s240 + $0x50] sm:$0xff]
        %v252 = vld [vmem:[%s240 + $0x58] sm:$0x3]
        %v253 = vld [vmem:[%s240 + $0x60] sm:$0xff]
        %v254 = vld [vmem:[%s240 + $0x68] sm:$0xff]
        %v255 = vld [vmem:[%s240 + $0x70] sm:$0x3]
        %v256 = vld [vmem:[%s240 + $0x78] sm:$0xff]
        %v257 = vld [vmem:[%s240 + $0x80] sm:$0xff]
        %v258 = vld [vmem:[%s240 + $0x88] sm:$0x3]
        %v259 = vld [vmem:[%s240 + $0x90] sm:$0xff]
        %v260 = vld [vmem:[%s240 + $0x98] sm:$0xff]
        %v261 = vld [vmem:[%s240 + $0xa0] sm:$0x3]
        %v262 = vld [vmem:[%s240 + $0xa8] sm:$0xff]
        %v263 = vld [vmem:[%s240 + $0xb0] sm:$0xff]
        %v264 = vld [vmem:[%s240 + $0xb8] sm:$0x3]
        %vm265 = vcmask 31744
        %266 = vst.msk [vmem:[#allocation2] sm:$0xff] %vm265, %v241
        %267 = vst.msk [vmem:[#allocation2 + $0x8] sm:$0xff] %vm265, %v242
        %268 = vst.msk [vmem:[#allocation2 + $0x10] sm:$0xff] %vm265, %v244
        %269 = vst.msk [vmem:[#allocation2 + $0x18] sm:$0xff] %vm265, %v245
        %270 = vst.msk [vmem:[#allocation2 + $0x20] sm:$0xff] %vm265, %v247
        %271 = vst.msk [vmem:[#allocation2 + $0x28] sm:$0xff] %vm265, %v248
        %272 = vst.msk [vmem:[#allocation2 + $0x30] sm:$0xff] %vm265, %v250
        %273 = vst.msk [vmem:[#allocation2 + $0x38] sm:$0xff] %vm265, %v251
        %274 = vst.msk [vmem:[#allocation2 + $0x40] sm:$0xff] %vm265, %v253
        %275 = vst.msk [vmem:[#allocation2 + $0x48] sm:$0xff] %vm265, %v254
        %276 = vst.msk [vmem:[#allocation2 + $0x50] sm:$0xff] %vm265, %v256
        %277 = vst.msk [vmem:[#allocation2 + $0x58] sm:$0xff] %vm265, %v257
        %278 = vst.msk [vmem:[#allocation2 + $0x60] sm:$0xff] %vm265, %v259
        %279 = vst.msk [vmem:[#allocation2 + $0x68] sm:$0xff] %vm265, %v260
        %280 = vst.msk [vmem:[#allocation2 + $0x70] sm:$0xff] %vm265, %v262
        %281 = vst.msk [vmem:[#allocation2 + $0x78] sm:$0xff] %vm265, %v263
        %vm306 = vcmask 1046528
        %v307 = vrot.slane %v241, 1
        %v308 = vrot.slane %v242, 1
        %v309 = vsel %vm306, %v307, %v308
        %v310 = vrot.slane %v243, 1
        %v311 = vsel %vm306, %v308, %v310
        %v312 = vrot.slane %v244, 1
        %v313 = vrot.slane %v245, 1
        %v314 = vsel %vm306, %v312, %v313
        %v315 = vrot.slane %v246, 1
        %v316 = vsel %vm306, %v313, %v315
        %v317 = vrot.slane %v247, 1
        %v318 = vrot.slane %v248, 1
        %v319 = vsel %vm306, %v317, %v318
        %v320 = vrot.slane %v249, 1
        %v321 = vsel %vm306, %v318, %v320
        %v322 = vrot.slane %v250, 1
        %v323 = vrot.slane %v251, 1
        %v324 = vsel %vm306, %v322, %v323
        %v325 = vrot.slane %v252, 1
        %v326 = vsel %vm306, %v323, %v325
        %v327 = vrot.slane %v253, 1
        %v328 = vrot.slane %v254, 1
        %v329 = vsel %vm306, %v327, %v328
        %v330 = vrot.slane %v255, 1
        %v331 = vsel %vm306, %v328, %v330
        %v332 = vrot.slane %v256, 1
        %v333 = vrot.slane %v257, 1
        %v334 = vsel %vm306, %v332, %v333
        %v335 = vrot.slane %v258, 1
        %v336 = vsel %vm306, %v333, %v335
        %v337 = vrot.slane %v259, 1
        %v338 = vrot.slane %v260, 1
        %v339 = vsel %vm306, %v337, %v338
        %v340 = vrot.slane %v261, 1
        %v341 = vsel %vm306, %v338, %v340
        %v342 = vrot.slane %v262, 1
        %v343 = vrot.slane %v263, 1
        %v344 = vsel %vm306, %v342, %v343
        %v345 = vrot.slane %v264, 1
        %v346 = vsel %vm306, %v343, %v345
        %347 = vrot.lane.b32.xlu0 %v309, 4
        %v348 = vpop.permute.xlu0 %347
        %349 = vrot.lane.b32.xlu0 %v311, 4
        %v350 = vpop.permute.xlu0 %349
        %351 = vrot.lane.b32.xlu0 %v314, 4
        %v352 = vpop.permute.xlu0 %351
        %353 = vrot.lane.b32.xlu0 %v316, 4
        %v354 = vpop.permute.xlu0 %353
        %355 = vrot.lane.b32.xlu0 %v319, 4
        %v356 = vpop.permute.xlu0 %355
        %357 = vrot.lane.b32.xlu0 %v321, 4
        %v358 = vpop.permute.xlu0 %357
        %359 = vrot.lane.b32.xlu0 %v324, 4
        %v360 = vpop.permute.xlu0 %359
        %361 = vrot.lane.b32.xlu0 %v326, 4
        %v362 = vpop.permute.xlu0 %361
        %363 = vrot.lane.b32.xlu0 %v329, 4
        %v364 = vpop.permute.xlu0 %363
        %365 = vrot.lane.b32.xlu0 %v331, 4
        %v366 = vpop.permute.xlu0 %365
        %367 = vrot.lane.b32.xlu0 %v334, 4
        %v368 = vpop.permute.xlu0 %367
        %369 = vrot.lane.b32.xlu0 %v336, 4
        %v370 = vpop.permute.xlu0 %369
        %371 = vrot.lane.b32.xlu0 %v339, 4
        %v372 = vpop.permute.xlu0 %371
        %373 = vrot.lane.b32.xlu0 %v341, 4
        %v374 = vpop.permute.xlu0 %373
        %375 = vrot.lane.b32.xlu0 %v344, 4
        %v376 = vpop.permute.xlu0 %375
        %377 = vrot.lane.b32.xlu0 %v346, 4
        %v378 = vpop.permute.xlu0 %377
        %vm395 = vcmask 64544
        %396 = vst.msk [vmem:[#allocation2] sm:$0xff] %vm395, %v348
        %397 = vst.msk [vmem:[#allocation2 + $0x8] sm:$0xff] %vm395, %v350
        %398 = vst.msk [vmem:[#allocation2 + $0x10] sm:$0xff] %vm395, %v352
        %399 = vst.msk [vmem:[#allocation2 + $0x18] sm:$0xff] %vm395, %v354
        %400 = vst.msk [vmem:[#allocation2 + $0x20] sm:$0xff] %vm395, %v356
        %401 = vst.msk [vmem:[#allocation2 + $0x28] sm:$0xff] %vm395, %v358
        %402 = vst.msk [vmem:[#allocation2 + $0x30] sm:$0xff] %vm395, %v360
        %403 = vst.msk [vmem:[#allocation2 + $0x38] sm:$0xff] %vm395, %v362
        %404 = vst.msk [vmem:[#allocation2 + $0x40] sm:$0xff] %vm395, %v364
        %405 = vst.msk [vmem:[#allocation2 + $0x48] sm:$0xff] %vm395, %v366
        %406 = vst.msk [vmem:[#allocation2 + $0x50] sm:$0xff] %vm395, %v368
        %407 = vst.msk [vmem:[#allocation2 + $0x58] sm:$0xff] %vm395, %v370
        %408 = vst.msk [vmem:[#allocation2 + $0x60] sm:$0xff] %vm395, %v372
        %409 = vst.msk [vmem:[#allocation2 + $0x68] sm:$0xff] %vm395, %v374
        %410 = vst.msk [vmem:[#allocation2 + $0x70] sm:$0xff] %vm395, %v376
        %411 = vst.msk [vmem:[#allocation2 + $0x78] sm:$0xff] %vm395, %v378
        %vm412 = vcmask 1045504
        %v413 = vrot.slane %v241, 2
        %v414 = vrot.slane %v242, 2
        %v415 = vsel %vm412, %v413, %v414
        %v416 = vrot.slane %v243, 2
        %v417 = vsel %vm412, %v414, %v416
        %v418 = vrot.slane %v244, 2
        %v419 = vrot.slane %v245, 2
        %v420 = vsel %vm412, %v418, %v419
        %v421 = vrot.slane %v246, 2
        %v422 = vsel %vm412, %v419, %v421
        %v423 = vrot.slane %v247, 2
        %v424 = vrot.slane %v248, 2
        %v425 = vsel %vm412, %v423, %v424
        %v426 = vrot.slane %v249, 2
        %v427 = vsel %vm412, %v424, %v426
        %v428 = vrot.slane %v250, 2
        %v429 = vrot.slane %v251, 2
        %v430 = vsel %vm412, %v428, %v429
        %v431 = vrot.slane %v252, 2
        %v432 = vsel %vm412, %v429, %v431
        %v433 = vrot.slane %v253, 2
        %v434 = vrot.slane %v254, 2
        %v435 = vsel %vm412, %v433, %v434
        %v436 = vrot.slane %v255, 2
        %v437 = vsel %vm412, %v434, %v436
        %v438 = vrot.slane %v256, 2
        %v439 = vrot.slane %v257, 2
        %v440 = vsel %vm412, %v438, %v439
        %v441 = vrot.slane %v258, 2
        %v442 = vsel %vm412, %v439, %v441
        %v443 = vrot.slane %v259, 2
        %v444 = vrot.slane %v260, 2
        %v445 = vsel %vm412, %v443, %v444
        %v446 = vrot.slane %v261, 2
        %v447 = vsel %vm412, %v444, %v446
        %v448 = vrot.slane %v262, 2
        %v449 = vrot.slane %v263, 2
        %v450 = vsel %vm412, %v448, %v449
        %v451 = vrot.slane %v264, 2
        %v452 = vsel %vm412, %v449, %v451
        %453 = vrot.lane.b32.xlu0 %v415, 8
        %v454 = vpop.permute.xlu0 %453
        %455 = vrot.lane.b32.xlu0 %v417, 8
        %v456 = vpop.permute.xlu0 %455
        %457 = vrot.lane.b32.xlu0 %v420, 8
        %v458 = vpop.permute.xlu0 %457
        %459 = vrot.lane.b32.xlu0 %v422, 8
        %v460 = vpop.permute.xlu0 %459
        %461 = vrot.lane.b32.xlu0 %v425, 8
        %v462 = vpop.permute.xlu0 %461
        %463 = vrot.lane.b32.xlu0 %v427, 8
        %v464 = vpop.permute.xlu0 %463
        %465 = vrot.lane.b32.xlu0 %v430, 8
        %v466 = vpop.permute.xlu0 %465
        %467 = vrot.lane.b32.xlu0 %v432, 8
        %v468 = vpop.permute.xlu0 %467
        %469 = vrot.lane.b32.xlu0 %v435, 8
        %v470 = vpop.permute.xlu0 %469
        %471 = vrot.lane.b32.xlu0 %v437, 8
        %v472 = vpop.permute.xlu0 %471
        %473 = vrot.lane.b32.xlu0 %v440, 8
        %v474 = vpop.permute.xlu0 %473
        %475 = vrot.lane.b32.xlu0 %v442, 8
        %v476 = vpop.permute.xlu0 %475
        %477 = vrot.lane.b32.xlu0 %v445, 8
        %v478 = vpop.permute.xlu0 %477
        %479 = vrot.lane.b32.xlu0 %v447, 8
        %v480 = vpop.permute.xlu0 %479
        %481 = vrot.lane.b32.xlu0 %v450, 8
        %v482 = vpop.permute.xlu0 %481
        %483 = vrot.lane.b32.xlu0 %v452, 8
        %v484 = vpop.permute.xlu0 %483
        %vm501 = vcmask 97344
        %502 = vst.msk [vmem:[#allocation2] sm:$0xff] %vm501, %v454
        %503 = vst.msk [vmem:[#allocation2 + $0x8] sm:$0xff] %vm501, %v456
        %504 = vst.msk [vmem:[#allocation2 + $0x10] sm:$0xff] %vm501, %v458
        %505 = vst.msk [vmem:[#allocation2 + $0x18] sm:$0xff] %vm501, %v460
        %506 = vst.msk [vmem:[#allocation2 + $0x20] sm:$0xff] %vm501, %v462
        %507 = vst.msk [vmem:[#allocation2 + $0x28] sm:$0xff] %vm501, %v464
        %508 = vst.msk [vmem:[#allocation2 + $0x30] sm:$0xff] %vm501, %v466
        %509 = vst.msk [vmem:[#allocation2 + $0x38] sm:$0xff] %vm501, %v468
        %510 = vst.msk [vmem:[#allocation2 + $0x40] sm:$0xff] %vm501, %v470
        %511 = vst.msk [vmem:[#allocation2 + $0x48] sm:$0xff] %vm501, %v472
        %512 = vst.msk [vmem:[#allocation2 + $0x50] sm:$0xff] %vm501, %v474
        %513 = vst.msk [vmem:[#allocation2 + $0x58] sm:$0xff] %vm501, %v476
        %514 = vst.msk [vmem:[#allocation2 + $0x60] sm:$0xff] %vm501, %v478
        %515 = vst.msk [vmem:[#allocation2 + $0x68] sm:$0xff] %vm501, %v480
        %516 = vst.msk [vmem:[#allocation2 + $0x70] sm:$0xff] %vm501, %v482
        %517 = vst.msk [vmem:[#allocation2 + $0x78] sm:$0xff] %vm501, %v484
        %s518 = sadd.s32 %s238, 1
        %s519 = smul.u32 %s518, 24
        %s520 = scalar_lea.vmem %s225, %s519
        %v521 = vld [vmem:[%s520] sm:$0xff]
        %v522 = vld [vmem:[%s520 + $0x8] sm:$0xff]
        %v523 = vld [vmem:[%s520 + $0x10] sm:$0x3]
        %v524 = vld [vmem:[%s520 + $0x18] sm:$0xff]
        %v525 = vld [vmem:[%s520 + $0x20] sm:$0xff]
        %v526 = vld [vmem:[%s520 + $0x28] sm:$0x3]
        %v527 = vld [vmem:[%s520 + $0x30] sm:$0xff]
        %v528 = vld [vmem:[%s520 + $0x38] sm:$0xff]
        %v529 = vld [vmem:[%s520 + $0x40] sm:$0x3]
        %v530 = vld [vmem:[%s520 + $0x48] sm:$0xff]
        %v531 = vld [vmem:[%s520 + $0x50] sm:$0xff]
        %v532 = vld [vmem:[%s520 + $0x58] sm:$0x3]
        %v533 = vld [vmem:[%s520 + $0x60] sm:$0xff]
        %v534 = vld [vmem:[%s520 + $0x68] sm:$0xff]
        %v535 = vld [vmem:[%s520 + $0x70] sm:$0x3]
        %v536 = vld [vmem:[%s520 + $0x78] sm:$0xff]
        %v537 = vld [vmem:[%s520 + $0x80] sm:$0xff]
        %v538 = vld [vmem:[%s520 + $0x88] sm:$0x3]
        %v539 = vld [vmem:[%s520 + $0x90] sm:$0xff]
        %v540 = vld [vmem:[%s520 + $0x98] sm:$0xff]
        %v541 = vld [vmem:[%s520 + $0xa0] sm:$0x3]
        %v542 = vld [vmem:[%s520 + $0xa8] sm:$0xff]
        %v543 = vld [vmem:[%s520 + $0xb0] sm:$0xff]
        %v544 = vld [vmem:[%s520 + $0xb8] sm:$0x3]
        %561 = vrot.lane.b32.xlu0 %v521, 12
        %v562 = vpop.permute.xlu0 %561
        %563 = vrot.lane.b32.xlu0 %v522, 12
        %v564 = vpop.permute.xlu0 %563
        %565 = vrot.lane.b32.xlu0 %v524, 12
        %v566 = vpop.permute.xlu0 %565
        %567 = vrot.lane.b32.xlu0 %v525, 12
        %v568 = vpop.permute.xlu0 %567
        %569 = vrot.lane.b32.xlu0 %v527, 12
        %v570 = vpop.permute.xlu0 %569
        %571 = vrot.lane.b32.xlu0 %v528, 12
        %v572 = vpop.permute.xlu0 %571
        %573 = vrot.lane.b32.xlu0 %v530, 12
        %v574 = vpop.permute.xlu0 %573
        %575 = vrot.lane.b32.xlu0 %v531, 12
        %v576 = vpop.permute.xlu0 %575
        %577 = vrot.lane.b32.xlu0 %v533, 12
        %v578 = vpop.permute.xlu0 %577
        %579 = vrot.lane.b32.xlu0 %v534, 12
        %v580 = vpop.permute.xlu0 %579
        %581 = vrot.lane.b32.xlu0 %v536, 12
        %v582 = vpop.permute.xlu0 %581
        %583 = vrot.lane.b32.xlu0 %v537, 12
        %v584 = vpop.permute.xlu0 %583
        %585 = vrot.lane.b32.xlu0 %v539, 12
        %v586 = vpop.permute.xlu0 %585
        %587 = vrot.lane.b32.xlu0 %v540, 12
        %v588 = vpop.permute.xlu0 %587
        %589 = vrot.lane.b32.xlu0 %v542, 12
        %v590 = vpop.permute.xlu0 %589
        %591 = vrot.lane.b32.xlu0 %v543, 12
        %v592 = vpop.permute.xlu0 %591
        %vm609 = vcmask 130144
        %610 = vst.msk [vmem:[#allocation2] sm:$0xff] %vm609, %v562
        %611 = vst.msk [vmem:[#allocation2 + $0x8] sm:$0xff] %vm609, %v564
        %612 = vst.msk [vmem:[#allocation2 + $0x10] sm:$0xff] %vm609, %v566
        %613 = vst.msk [vmem:[#allocation2 + $0x18] sm:$0xff] %vm609, %v568
        %614 = vst.msk [vmem:[#allocation2 + $0x20] sm:$0xff] %vm609, %v570
        %615 = vst.msk [vmem:[#allocation2 + $0x28] sm:$0xff] %vm609, %v572
        %616 = vst.msk [vmem:[#allocation2 + $0x30] sm:$0xff] %vm609, %v574
        %617 = vst.msk [vmem:[#allocation2 + $0x38] sm:$0xff] %vm609, %v576
        %618 = vst.msk [vmem:[#allocation2 + $0x40] sm:$0xff] %vm609, %v578
        %619 = vst.msk [vmem:[#allocation2 + $0x48] sm:$0xff] %vm609, %v580
        %620 = vst.msk [vmem:[#allocation2 + $0x50] sm:$0xff] %vm609, %v582
        %621 = vst.msk [vmem:[#allocation2 + $0x58] sm:$0xff] %vm609, %v584
        %622 = vst.msk [vmem:[#allocation2 + $0x60] sm:$0xff] %vm609, %v586
        %623 = vst.msk [vmem:[#allocation2 + $0x68] sm:$0xff] %vm609, %v588
        %624 = vst.msk [vmem:[#allocation2 + $0x70] sm:$0xff] %vm609, %v590
        %625 = vst.msk [vmem:[#allocation2 + $0x78] sm:$0xff] %vm609, %v592
        %v634 = vrot.slane %v521, 1
        %v635 = vrot.slane %v522, 1
        %v636 = vsel %vm306, %v634, %v635
        %v637 = vrot.slane %v523, 1
        %v638 = vsel %vm306, %v635, %v637
        %v639 = vrot.slane %v524, 1
        %v640 = vrot.slane %v525, 1
        %v641 = vsel %vm306, %v639, %v640
        %v642 = vrot.slane %v526, 1
        %v643 = vsel %vm306, %v640, %v642
        %v644 = vrot.slane %v527, 1
        %v645 = vrot.slane %v528, 1
        %v646 = vsel %vm306, %v644, %v645
        %v647 = vrot.slane %v529, 1
        %v648 = vsel %vm306, %v645, %v647
        %v649 = vrot.slane %v530, 1
        %v650 = vrot.slane %v531, 1
        %v651 = vsel %vm306, %v649, %v650
        %v652 = vrot.slane %v532, 1
        %v653 = vsel %vm306, %v650, %v652
        %v654 = vrot.slane %v533, 1
        %v655 = vrot.slane %v534, 1
        %v656 = vsel %vm306, %v654, %v655
        %v657 = vrot.slane %v535, 1
        %v658 = vsel %vm306, %v655, %v657
        %v659 = vrot.slane %v536, 1
        %v660 = vrot.slane %v537, 1
        %v661 = vsel %vm306, %v659, %v660
        %v662 = vrot.slane %v538, 1
        %v663 = vsel %vm306, %v660, %v662
        %v664 = vrot.slane %v539, 1
        %v665 = vrot.slane %v540, 1
        %v666 = vsel %vm306, %v664, %v665
        %v667 = vrot.slane %v541, 1
        %v668 = vsel %vm306, %v665, %v667
        %v669 = vrot.slane %v542, 1
        %v670 = vrot.slane %v543, 1
        %v671 = vsel %vm306, %v669, %v670
        %v672 = vrot.slane %v544, 1
        %v673 = vsel %vm306, %v670, %v672
        %674 = vrot.lane.b32.xlu0 %v636, 16
        %v675 = vpop.permute.xlu0 %674
        %676 = vrot.lane.b32.xlu0 %v638, 16
        %v677 = vpop.permute.xlu0 %676
        %678 = vrot.lane.b32.xlu0 %v641, 16
        %v679 = vpop.permute.xlu0 %678
        %680 = vrot.lane.b32.xlu0 %v643, 16
        %v681 = vpop.permute.xlu0 %680
        %682 = vrot.lane.b32.xlu0 %v646, 16
        %v683 = vpop.permute.xlu0 %682
        %684 = vrot.lane.b32.xlu0 %v648, 16
        %v685 = vpop.permute.xlu0 %684
        %686 = vrot.lane.b32.xlu0 %v651, 16
        %v687 = vpop.permute.xlu0 %686
        %688 = vrot.lane.b32.xlu0 %v653, 16
        %v689 = vpop.permute.xlu0 %688
        %690 = vrot.lane.b32.xlu0 %v656, 16
        %v691 = vpop.permute.xlu0 %690
        %692 = vrot.lane.b32.xlu0 %v658, 16
        %v693 = vpop.permute.xlu0 %692
        %694 = vrot.lane.b32.xlu0 %v661, 16
        %v695 = vpop.permute.xlu0 %694
        %696 = vrot.lane.b32.xlu0 %v663, 16
        %v697 = vpop.permute.xlu0 %696
        %698 = vrot.lane.b32.xlu0 %v666, 16
        %v699 = vpop.permute.xlu0 %698
        %700 = vrot.lane.b32.xlu0 %v668, 16
        %v701 = vpop.permute.xlu0 %700
        %702 = vrot.lane.b32.xlu0 %v671, 16
        %v703 = vpop.permute.xlu0 %702
        %704 = vrot.lane.b32.xlu0 %v673, 16
        %v705 = vpop.permute.xlu0 %704
        %vm722 = vcmask 162944
        %723 = vst.msk [vmem:[#allocation2] sm:$0xff] %vm722, %v675
        %724 = vst.msk [vmem:[#allocation2 + $0x8] sm:$0xff] %vm722, %v677
        %725 = vst.msk [vmem:[#allocation2 + $0x10] sm:$0xff] %vm722, %v679
        %726 = vst.msk [vmem:[#allocation2 + $0x18] sm:$0xff] %vm722, %v681
        %727 = vst.msk [vmem:[#allocation2 + $0x20] sm:$0xff] %vm722, %v683
        %728 = vst.msk [vmem:[#allocation2 + $0x28] sm:$0xff] %vm722, %v685
        %729 = vst.msk [vmem:[#allocation2 + $0x30] sm:$0xff] %vm722, %v687
        %730 = vst.msk [vmem:[#allocation2 + $0x38] sm:$0xff] %vm722, %v689
        %731 = vst.msk [vmem:[#allocation2 + $0x40] sm:$0xff] %vm722, %v691
        %732 = vst.msk [vmem:[#allocation2 + $0x48] sm:$0xff] %vm722, %v693
        %733 = vst.msk [vmem:[#allocation2 + $0x50] sm:$0xff] %vm722, %v695
        %734 = vst.msk [vmem:[#allocation2 + $0x58] sm:$0xff] %vm722, %v697
        %735 = vst.msk [vmem:[#allocation2 + $0x60] sm:$0xff] %vm722, %v699
        %736 = vst.msk [vmem:[#allocation2 + $0x68] sm:$0xff] %vm722, %v701
        %737 = vst.msk [vmem:[#allocation2 + $0x70] sm:$0xff] %vm722, %v703
        %738 = vst.msk [vmem:[#allocation2 + $0x78] sm:$0xff] %vm722, %v705
        %v739 = vrot.slane %v521, 2
        %v740 = vrot.slane %v522, 2
        %v741 = vsel %vm412, %v739, %v740
        %v742 = vrot.slane %v523, 2
        %v743 = vsel %vm412, %v740, %v742
        %v744 = vrot.slane %v524, 2
        %v745 = vrot.slane %v525, 2
        %v746 = vsel %vm412, %v744, %v745
        %v747 = vrot.slane %v526, 2
        %v748 = vsel %vm412, %v745, %v747
        %v749 = vrot.slane %v527, 2
        %v750 = vrot.slane %v528, 2
        %v751 = vsel %vm412, %v749, %v750
        %v752 = vrot.slane %v529, 2
        %v753 = vsel %vm412, %v750, %v752
        %v754 = vrot.slane %v530, 2
        %v755 = vrot.slane %v531, 2
        %v756 = vsel %vm412, %v754, %v755
        %v757 = vrot.slane %v532, 2
        %v758 = vsel %vm412, %v755, %v757
        %v759 = vrot.slane %v533, 2
        %v760 = vrot.slane %v534, 2
        %v761 = vsel %vm412, %v759, %v760
        %v762 = vrot.slane %v535, 2
        %v763 = vsel %vm412, %v760, %v762
        %v764 = vrot.slane %v536, 2
        %v765 = vrot.slane %v537, 2
        %v766 = vsel %vm412, %v764, %v765
        %v767 = vrot.slane %v538, 2
        %v768 = vsel %vm412, %v765, %v767
        %v769 = vrot.slane %v539, 2
        %v770 = vrot.slane %v540, 2
        %v771 = vsel %vm412, %v769, %v770
        %v772 = vrot.slane %v541, 2
        %v773 = vsel %vm412, %v770, %v772
        %v774 = vrot.slane %v542, 2
        %v775 = vrot.slane %v543, 2
        %v776 = vsel %vm412, %v774, %v775
        %v777 = vrot.slane %v544, 2
        %v778 = vsel %vm412, %v775, %v777
        %779 = vrot.lane.b32.xlu0 %v741, 20
        %v780 = vpop.permute.xlu0 %779
        %781 = vrot.lane.b32.xlu0 %v743, 20
        %v782 = vpop.permute.xlu0 %781
        %783 = vrot.lane.b32.xlu0 %v746, 20
        %v784 = vpop.permute.xlu0 %783
        %785 = vrot.lane.b32.xlu0 %v748, 20
        %v786 = vpop.permute.xlu0 %785
        %787 = vrot.lane.b32.xlu0 %v751, 20
        %v788 = vpop.permute.xlu0 %787
        %789 = vrot.lane.b32.xlu0 %v753, 20
        %v790 = vpop.permute.xlu0 %789
        %791 = vrot.lane.b32.xlu0 %v756, 20
        %v792 = vpop.permute.xlu0 %791
        %793 = vrot.lane.b32.xlu0 %v758, 20
        %v794 = vpop.permute.xlu0 %793
        %795 = vrot.lane.b32.xlu0 %v761, 20
        %v796 = vpop.permute.xlu0 %795
        %797 = vrot.lane.b32.xlu0 %v763, 20
        %v798 = vpop.permute.xlu0 %797
        %799 = vrot.lane.b32.xlu0 %v766, 20
        %v800 = vpop.permute.xlu0 %799
        %801 = vrot.lane.b32.xlu0 %v768, 20
        %v802 = vpop.permute.xlu0 %801
        %803 = vrot.lane.b32.xlu0 %v771, 20
        %v804 = vpop.permute.xlu0 %803
        %805 = vrot.lane.b32.xlu0 %v773, 20
        %v806 = vpop.permute.xlu0 %805
        %807 = vrot.lane.b32.xlu0 %v776, 20
        %v808 = vpop.permute.xlu0 %807
        %809 = vrot.lane.b32.xlu0 %v778, 20
        %v810 = vpop.permute.xlu0 %809
        %vm827 = vcmask 195744
        %828 = vst.msk [vmem:[#allocation2] sm:$0xff] %vm827, %v780
        %829 = vst.msk [vmem:[#allocation2 + $0x8] sm:$0xff] %vm827, %v782
        %830 = vst.msk [vmem:[#allocation2 + $0x10] sm:$0xff] %vm827, %v784
        %831 = vst.msk [vmem:[#allocation2 + $0x18] sm:$0xff] %vm827, %v786
        %832 = vst.msk [vmem:[#allocation2 + $0x20] sm:$0xff] %vm827, %v788
        %833 = vst.msk [vmem:[#allocation2 + $0x28] sm:$0xff] %vm827, %v790
        %834 = vst.msk [vmem:[#allocation2 + $0x30] sm:$0xff] %vm827, %v792
        %835 = vst.msk [vmem:[#allocation2 + $0x38] sm:$0xff] %vm827, %v794
        %836 = vst.msk [vmem:[#allocation2 + $0x40] sm:$0xff] %vm827, %v796
        %837 = vst.msk [vmem:[#allocation2 + $0x48] sm:$0xff] %vm827, %v798
        %838 = vst.msk [vmem:[#allocation2 + $0x50] sm:$0xff] %vm827, %v800
        %839 = vst.msk [vmem:[#allocation2 + $0x58] sm:$0xff] %vm827, %v802
        %840 = vst.msk [vmem:[#allocation2 + $0x60] sm:$0xff] %vm827, %v804
        %841 = vst.msk [vmem:[#allocation2 + $0x68] sm:$0xff] %vm827, %v806
        %842 = vst.msk [vmem:[#allocation2 + $0x70] sm:$0xff] %vm827, %v808
        %843 = vst.msk [vmem:[#allocation2 + $0x78] sm:$0xff] %vm827, %v810
        %s844 = sadd.s32 %s238, 2
        %s845 = smul.u32 %s844, 24
        %s846 = scalar_lea.vmem %s225, %s845
        %v847 = vld [vmem:[%s846] sm:$0xff]
        %v848 = vld [vmem:[%s846 + $0x8] sm:$0xff]
        %v849 = vld [vmem:[%s846 + $0x10] sm:$0x3]
        %v850 = vld [vmem:[%s846 + $0x18] sm:$0xff]
        %v851 = vld [vmem:[%s846 + $0x20] sm:$0xff]
        %v852 = vld [vmem:[%s846 + $0x28] sm:$0x3]
        %v853 = vld [vmem:[%s846 + $0x30] sm:$0xff]
        %v854 = vld [vmem:[%s846 + $0x38] sm:$0xff]
        %v855 = vld [vmem:[%s846 + $0x40] sm:$0x3]
        %v856 = vld [vmem:[%s846 + $0x48] sm:$0xff]
        %v857 = vld [vmem:[%s846 + $0x50] sm:$0xff]
        %v858 = vld [vmem:[%s846 + $0x58] sm:$0x3]
        %v859 = vld [vmem:[%s846 + $0x60] sm:$0xff]
        %v860 = vld [vmem:[%s846 + $0x68] sm:$0xff]
        %v861 = vld [vmem:[%s846 + $0x70] sm:$0x3]
        %v862 = vld [vmem:[%s846 + $0x78] sm:$0xff]
        %v863 = vld [vmem:[%s846 + $0x80] sm:$0xff]
        %v864 = vld [vmem:[%s846 + $0x88] sm:$0x3]
        %v865 = vld [vmem:[%s846 + $0x90] sm:$0xff]
        %v866 = vld [vmem:[%s846 + $0x98] sm:$0xff]
        %v867 = vld [vmem:[%s846 + $0xa0] sm:$0x3]
        %v868 = vld [vmem:[%s846 + $0xa8] sm:$0xff]
        %v869 = vld [vmem:[%s846 + $0xb0] sm:$0xff]
        %v870 = vld [vmem:[%s846 + $0xb8] sm:$0x3]
        %887 = vrot.lane.b32.xlu0 %v847, 24
        %v888 = vpop.permute.xlu0 %887
        %889 = vrot.lane.b32.xlu0 %v848, 24
        %v890 = vpop.permute.xlu0 %889
        %891 = vrot.lane.b32.xlu0 %v850, 24
        %v892 = vpop.permute.xlu0 %891
        %893 = vrot.lane.b32.xlu0 %v851, 24
        %v894 = vpop.permute.xlu0 %893
        %895 = vrot.lane.b32.xlu0 %v853, 24
        %v896 = vpop.permute.xlu0 %895
        %897 = vrot.lane.b32.xlu0 %v854, 24
        %v898 = vpop.permute.xlu0 %897
        %899 = vrot.lane.b32.xlu0 %v856, 24
        %v900 = vpop.permute.xlu0 %899
        %901 = vrot.lane.b32.xlu0 %v857, 24
        %v902 = vpop.permute.xlu0 %901
        %903 = vrot.lane.b32.xlu0 %v859, 24
        %v904 = vpop.permute.xlu0 %903
        %905 = vrot.lane.b32.xlu0 %v860, 24
        %v906 = vpop.permute.xlu0 %905
        %907 = vrot.lane.b32.xlu0 %v862, 24
        %v908 = vpop.permute.xlu0 %907
        %909 = vrot.lane.b32.xlu0 %v863, 24
        %v910 = vpop.permute.xlu0 %909
        %911 = vrot.lane.b32.xlu0 %v865, 24
        %v912 = vpop.permute.xlu0 %911
        %913 = vrot.lane.b32.xlu0 %v866, 24
        %v914 = vpop.permute.xlu0 %913
        %915 = vrot.lane.b32.xlu0 %v868, 24
        %v916 = vpop.permute.xlu0 %915
        %917 = vrot.lane.b32.xlu0 %v869, 24
        %v918 = vpop.permute.xlu0 %917
        %vm935 = vcmask 228544
        %936 = vst.msk [vmem:[#allocation2] sm:$0xff] %vm935, %v888
        %937 = vst.msk [vmem:[#allocation2 + $0x8] sm:$0xff] %vm935, %v890
        %938 = vst.msk [vmem:[#allocation2 + $0x10] sm:$0xff] %vm935, %v892
        %939 = vst.msk [vmem:[#allocation2 + $0x18] sm:$0xff] %vm935, %v894
        %940 = vst.msk [vmem:[#allocation2 + $0x20] sm:$0xff] %vm935, %v896
        %941 = vst.msk [vmem:[#allocation2 + $0x28] sm:$0xff] %vm935, %v898
        %942 = vst.msk [vmem:[#allocation2 + $0x30] sm:$0xff] %vm935, %v900
        %943 = vst.msk [vmem:[#allocation2 + $0x38] sm:$0xff] %vm935, %v902
        %944 = vst.msk [vmem:[#allocation2 + $0x40] sm:$0xff] %vm935, %v904
        %945 = vst.msk [vmem:[#allocation2 + $0x48] sm:$0xff] %vm935, %v906
        %946 = vst.msk [vmem:[#allocation2 + $0x50] sm:$0xff] %vm935, %v908
        %947 = vst.msk [vmem:[#allocation2 + $0x58] sm:$0xff] %vm935, %v910
        %948 = vst.msk [vmem:[#allocation2 + $0x60] sm:$0xff] %vm935, %v912
        %949 = vst.msk [vmem:[#allocation2 + $0x68] sm:$0xff] %vm935, %v914
        %950 = vst.msk [vmem:[#allocation2 + $0x70] sm:$0xff] %vm935, %v916
        %951 = vst.msk [vmem:[#allocation2 + $0x78] sm:$0xff] %vm935, %v918
        %v960 = vrot.slane %v847, 1
        %v961 = vrot.slane %v848, 1
        %v962 = vsel %vm306, %v960, %v961
        %v963 = vrot.slane %v849, 1
        %v964 = vsel %vm306, %v961, %v963
        %v965 = vrot.slane %v850, 1
        %v966 = vrot.slane %v851, 1
        %v967 = vsel %vm306, %v965, %v966
        %v968 = vrot.slane %v852, 1
        %v969 = vsel %vm306, %v966, %v968
        %v970 = vrot.slane %v853, 1
        %v971 = vrot.slane %v854, 1
        %v972 = vsel %vm306, %v970, %v971
        %v973 = vrot.slane %v855, 1
        %v974 = vsel %vm306, %v971, %v973
        %v975 = vrot.slane %v856, 1
        %v976 = vrot.slane %v857, 1
        %v977 = vsel %vm306, %v975, %v976
        %v978 = vrot.slane %v858, 1
        %v979 = vsel %vm306, %v976, %v978
        %v980 = vrot.slane %v859, 1
        %v981 = vrot.slane %v860, 1
        %v982 = vsel %vm306, %v980, %v981
        %v983 = vrot.slane %v861, 1
        %v984 = vsel %vm306, %v981, %v983
        %v985 = vrot.slane %v862, 1
        %v986 = vrot.slane %v863, 1
        %v987 = vsel %vm306, %v985, %v986
        %v988 = vrot.slane %v864, 1
        %v989 = vsel %vm306, %v986, %v988
        %v990 = vrot.slane %v865, 1
        %v991 = vrot.slane %v866, 1
        %v992 = vsel %vm306, %v990, %v991
        %v993 = vrot.slane %v867, 1
        %v994 = vsel %vm306, %v991, %v993
        %v995 = vrot.slane %v868, 1
        %v996 = vrot.slane %v869, 1
        %v997 = vsel %vm306, %v995, %v996
        %v998 = vrot.slane %v870, 1
        %v999 = vsel %vm306, %v996, %v998
        %1000 = vrot.lane.b32.xlu0 %v962, 28
        %v1001 = vpop.permute.xlu0 %1000
        %1002 = vrot.lane.b32.xlu0 %v964, 28
        %v1003 = vpop.permute.xlu0 %1002
        %1004 = vrot.lane.b32.xlu0 %v967, 28
        %v1005 = vpop.permute.xlu0 %1004
        %1006 = vrot.lane.b32.xlu0 %v969, 28
        %v1007 = vpop.permute.xlu0 %1006
        %1008 = vrot.lane.b32.xlu0 %v972, 28
        %v1009 = vpop.permute.xlu0 %1008
        %1010 = vrot.lane.b32.xlu0 %v974, 28
        %v1011 = vpop.permute.xlu0 %1010
        %1012 = vrot.lane.b32.xlu0 %v977, 28
        %v1013 = vpop.permute.xlu0 %1012
        %1014 = vrot.lane.b32.xlu0 %v979, 28
        %v1015 = vpop.permute.xlu0 %1014
        %1016 = vrot.lane.b32.xlu0 %v982, 28
        %v1017 = vpop.permute.xlu0 %1016
        %1018 = vrot.lane.b32.xlu0 %v984, 28
        %v1019 = vpop.permute.xlu0 %1018
        %1020 = vrot.lane.b32.xlu0 %v987, 28
        %v1021 = vpop.permute.xlu0 %1020
        %1022 = vrot.lane.b32.xlu0 %v989, 28
        %v1023 = vpop.permute.xlu0 %1022
        %1024 = vrot.lane.b32.xlu0 %v992, 28
        %v1025 = vpop.permute.xlu0 %1024
        %1026 = vrot.lane.b32.xlu0 %v994, 28
        %v1027 = vpop.permute.xlu0 %1026
        %1028 = vrot.lane.b32.xlu0 %v997, 28
        %v1029 = vpop.permute.xlu0 %1028
        %1030 = vrot.lane.b32.xlu0 %v999, 28
        %v1031 = vpop.permute.xlu0 %1030
        %vm1048 = vcmask 261344
        %1049 = vst.msk [vmem:[#allocation2] sm:$0xff] %vm1048, %v1001
        %1050 = vst.msk [vmem:[#allocation2 + $0x8] sm:$0xff] %vm1048, %v1003
        %1051 = vst.msk [vmem:[#allocation2 + $0x10] sm:$0xff] %vm1048, %v1005
        %1052 = vst.msk [vmem:[#allocation2 + $0x18] sm:$0xff] %vm1048, %v1007
        %1053 = vst.msk [vmem:[#allocation2 + $0x20] sm:$0xff] %vm1048, %v1009
        %1054 = vst.msk [vmem:[#allocation2 + $0x28] sm:$0xff] %vm1048, %v1011
        %1055 = vst.msk [vmem:[#allocation2 + $0x30] sm:$0xff] %vm1048, %v1013
        %1056 = vst.msk [vmem:[#allocation2 + $0x38] sm:$0xff] %vm1048, %v1015
        %1057 = vst.msk [vmem:[#allocation2 + $0x40] sm:$0xff] %vm1048, %v1017
        %1058 = vst.msk [vmem:[#allocation2 + $0x48] sm:$0xff] %vm1048, %v1019
        %1059 = vst.msk [vmem:[#allocation2 + $0x50] sm:$0xff] %vm1048, %v1021
        %1060 = vst.msk [vmem:[#allocation2 + $0x58] sm:$0xff] %vm1048, %v1023
        %1061 = vst.msk [vmem:[#allocation2 + $0x60] sm:$0xff] %vm1048, %v1025
        %1062 = vst.msk [vmem:[#allocation2 + $0x68] sm:$0xff] %vm1048, %v1027
        %1063 = vst.msk [vmem:[#allocation2 + $0x70] sm:$0xff] %vm1048, %v1029
        %1064 = vst.msk [vmem:[#allocation2 + $0x78] sm:$0xff] %vm1048, %v1031
        %v1065 = vrot.slane %v847, 2
        %v1066 = vrot.slane %v848, 2
        %v1067 = vsel %vm412, %v1065, %v1066
        %v1068 = vrot.slane %v849, 2
        %v1069 = vsel %vm412, %v1066, %v1068
        %v1070 = vrot.slane %v850, 2
        %v1071 = vrot.slane %v851, 2
        %v1072 = vsel %vm412, %v1070, %v1071
        %v1073 = vrot.slane %v852, 2
        %v1074 = vsel %vm412, %v1071, %v1073
        %v1075 = vrot.slane %v853, 2
        %v1076 = vrot.slane %v854, 2
        %v1077 = vsel %vm412, %v1075, %v1076
        %v1078 = vrot.slane %v855, 2
        %v1079 = vsel %vm412, %v1076, %v1078
        %v1080 = vrot.slane %v856, 2
        %v1081 = vrot.slane %v857, 2
        %v1082 = vsel %vm412, %v1080, %v1081
        %v1083 = vrot.slane %v858, 2
        %v1084 = vsel %vm412, %v1081, %v1083
        %v1085 = vrot.slane %v859, 2
        %v1086 = vrot.slane %v860, 2
        %v1087 = vsel %vm412, %v1085, %v1086
        %v1088 = vrot.slane %v861, 2
        %v1089 = vsel %vm412, %v1086, %v1088
        %v1090 = vrot.slane %v862, 2
        %v1091 = vrot.slane %v863, 2
        %v1092 = vsel %vm412, %v1090, %v1091
        %v1093 = vrot.slane %v864, 2
        %v1094 = vsel %vm412, %v1091, %v1093
        %v1095 = vrot.slane %v865, 2
        %v1096 = vrot.slane %v866, 2
        %v1097 = vsel %vm412, %v1095, %v1096
        %v1098 = vrot.slane %v867, 2
        %v1099 = vsel %vm412, %v1096, %v1098
        %v1100 = vrot.slane %v868, 2
        %v1101 = vrot.slane %v869, 2
        %v1102 = vsel %vm412, %v1100, %v1101
        %v1103 = vrot.slane %v870, 2
        %v1104 = vsel %vm412, %v1101, %v1103
        %1105 = vrot.lane.b32.xlu0 %v1067, 32
        %v1106 = vpop.permute.xlu0 %1105
        %1107 = vrot.lane.b32.xlu0 %v1069, 32
        %v1108 = vpop.permute.xlu0 %1107
        %1109 = vrot.lane.b32.xlu0 %v1072, 32
        %v1110 = vpop.permute.xlu0 %1109
        %1111 = vrot.lane.b32.xlu0 %v1074, 32
        %v1112 = vpop.permute.xlu0 %1111
        %1113 = vrot.lane.b32.xlu0 %v1077, 32
        %v1114 = vpop.permute.xlu0 %1113
        %1115 = vrot.lane.b32.xlu0 %v1079, 32
        %v1116 = vpop.permute.xlu0 %1115
        %1117 = vrot.lane.b32.xlu0 %v1082, 32
        %v1118 = vpop.permute.xlu0 %1117
        %1119 = vrot.lane.b32.xlu0 %v1084, 32
        %v1120 = vpop.permute.xlu0 %1119
        %1121 = vrot.lane.b32.xlu0 %v1087, 32
        %v1122 = vpop.permute.xlu0 %1121
        %1123 = vrot.lane.b32.xlu0 %v1089, 32
        %v1124 = vpop.permute.xlu0 %1123
        %1125 = vrot.lane.b32.xlu0 %v1092, 32
        %v1126 = vpop.permute.xlu0 %1125
        %1127 = vrot.lane.b32.xlu0 %v1094, 32
        %v1128 = vpop.permute.xlu0 %1127
        %1129 = vrot.lane.b32.xlu0 %v1097, 32
        %v1130 = vpop.permute.xlu0 %1129
        %1131 = vrot.lane.b32.xlu0 %v1099, 32
        %v1132 = vpop.permute.xlu0 %1131
        %1133 = vrot.lane.b32.xlu0 %v1102, 32
        %v1134 = vpop.permute.xlu0 %1133
        %1135 = vrot.lane.b32.xlu0 %v1104, 32
        %v1136 = vpop.permute.xlu0 %1135
        %vm1153 = vcmask 294144
        %1154 = vst.msk [vmem:[#allocation2] sm:$0xff] %vm1153, %v1106
        %1155 = vst.msk [vmem:[#allocation2 + $0x8] sm:$0xff] %vm1153, %v1108
        %1156 = vst.msk [vmem:[#allocation2 + $0x10] sm:$0xff] %vm1153, %v1110
        %1157 = vst.msk [vmem:[#allocation2 + $0x18] sm:$0xff] %vm1153, %v1112
        %1158 = vst.msk [vmem:[#allocation2 + $0x20] sm:$0xff] %vm1153, %v1114
        %1159 = vst.msk [vmem:[#allocation2 + $0x28] sm:$0xff] %vm1153, %v1116
        %1160 = vst.msk [vmem:[#allocation2 + $0x30] sm:$0xff] %vm1153, %v1118
        %1161 = vst.msk [vmem:[#allocation2 + $0x38] sm:$0xff] %vm1153, %v1120
        %1162 = vst.msk [vmem:[#allocation2 + $0x40] sm:$0xff] %vm1153, %v1122
        %1163 = vst.msk [vmem:[#allocation2 + $0x48] sm:$0xff] %vm1153, %v1124
        %1164 = vst.msk [vmem:[#allocation2 + $0x50] sm:$0xff] %vm1153, %v1126
        %1165 = vst.msk [vmem:[#allocation2 + $0x58] sm:$0xff] %vm1153, %v1128
        %1166 = vst.msk [vmem:[#allocation2 + $0x60] sm:$0xff] %vm1153, %v1130
        %1167 = vst.msk [vmem:[#allocation2 + $0x68] sm:$0xff] %vm1153, %v1132
        %1168 = vst.msk [vmem:[#allocation2 + $0x70] sm:$0xff] %vm1153, %v1134
        %1169 = vst.msk [vmem:[#allocation2 + $0x78] sm:$0xff] %vm1153, %v1136
        %v1170 = vld [vmem:[#allocation2] sm:$0xff]
        %v1171 = vld [vmem:[#allocation2 + $0x8] sm:$0xff]
        %v1172 = vld [vmem:[#allocation2 + $0x10] sm:$0xff]
        %v1173 = vld [vmem:[#allocation2 + $0x18] sm:$0xff]
        %v1174 = vld [vmem:[#allocation2 + $0x20] sm:$0xff]
        %v1175 = vld [vmem:[#allocation2 + $0x28] sm:$0xff]
        %v1176 = vld [vmem:[#allocation2 + $0x30] sm:$0xff]
        %v1177 = vld [vmem:[#allocation2 + $0x38] sm:$0xff]
        %v1178 = vld [vmem:[#allocation2 + $0x40] sm:$0xff]
        %v1179 = vld [vmem:[#allocation2 + $0x48] sm:$0xff]
        %v1180 = vld [vmem:[#allocation2 + $0x50] sm:$0xff]
        %v1181 = vld [vmem:[#allocation2 + $0x58] sm:$0xff]
        %v1182 = vld [vmem:[#allocation2 + $0x60] sm:$0xff]
        %v1183 = vld [vmem:[#allocation2 + $0x68] sm:$0xff]
        %v1184 = vld [vmem:[#allocation2 + $0x70] sm:$0xff]
        %v1185 = vld [vmem:[#allocation2 + $0x78] sm:$0xff]
        %v1186 = vpack.c.bf16 %v1171, %v1170
        %v1187 = vpack.c.bf16 %v1173, %v1172
        %v1188 = vpack.c.bf16 %v1175, %v1174
        %v1189 = vpack.c.bf16 %v1177, %v1176
        %v1190 = vpack.c.bf16 %v1179, %v1178
        %v1191 = vpack.c.bf16 %v1181, %v1180
        %v1192 = vpack.c.bf16 %v1183, %v1182
        %v1193 = vpack.c.bf16 %v1185, %v1184
        %v1194 = vld [vmem:[%s1] sm:$0xff]
        %v1195 = vld [vmem:[%s1 + $0x8] sm:$0xff]
        %v1196 = vld [vmem:[%s1 + $0x10] sm:$0xff]
        %v1197 = vld [vmem:[%s1 + $0x18] sm:$0xff]
        %v1198 = vld [vmem:[%s1 + $0x20] sm:$0x33]
        %v1199 = vld [vmem:[#allocation4] sm:$0x3]
        %v1201 = vlaneseq
        %v1202 = vshrl.u32 %v1201, 7
        %v1203 = vsub.s32 0, %v1202
        %v1204 = vrot.slane %v1199, %v1203
        %v1205 = vlaneseq
        %v1206 = vshrl.u32 %v1205, 7
        %v1207 = vsub.s32 1, %v1206
        %v1208 = vrot.slane %v1199, %v1207
        %v1216 = vunpack.c.l.b16 %v1194
        %v1217 = vunpack.c.h.b16 %v1194
        %v1218 = vunpack.c.l.b16 %v1195
        %v1219 = vunpack.c.h.b16 %v1195
        %v1220 = vunpack.c.l.b16 %v1196
        %v1221 = vunpack.c.h.b16 %v1196
        %v1222 = vunpack.c.l.b16 %v1197
        %v1223 = vunpack.c.h.b16 %v1197
        %v1224 = vunpack.c.l.b16 %v1198
        %v1225 = vunpack.c.h.b16 %v1198
        %v1226 = vpack.c.b16 %v1218, %v1216
        %v1227 = vpack.c.b16 %v1219, %v1217
        %v1228 = vpack.c.b16 %v1222, %v1220
        %v1229 = vpack.c.b16 %v1223, %v1221
        %v1230 = vpack.c.b16 %v1224, %v1224
        %v1231 = vpack.c.b16 %v1225, %v1225
        %vm1236 = vcmask 293888
        %v1238 = vsel %vm1236, %v1186, 0
        %v1241 = vsel %vm1236, %v1187, 0
        %v1244 = vsel %vm1236, %v1188, 0
        %v1247 = vsel %vm1236, %v1189, 0
        %v1250 = vsel %vm1236, %v1190, 0
        %v1253 = vsel %vm1236, %v1191, 0
        %v1256 = vsel %vm1236, %v1192, 0
        %v1259 = vsel %vm1236, %v1193, 0
        %vm1261 = vcmask 1041408
        %v1263 = vsel %vm1261, %v1230, 0
        %v1266 = vsel %vm1261, %v1231, 0
        %1268 = vmatprep.subr.bf16.mxu0 %v1227
        %1269 = vmatpush1.bf16.msra.mxu0 %v1226
        %1270 = vmatprep.subr.bf16.mxu0 %v1229
        %1271 = vmatpush1.bf16.msra.mxu0 %v1228
        %1272 = vmatprep.subr.bf16.mxu0 %v1266
        %1273 = vmatpush1.bf16.msra.mxu0 %v1263
        %1274 = vmatprep.subr.bf16.mxu0 0
        %1275 = vmatpush1.bf16.msra.mxu0 0
        %1276 = vmatprep.subr.bf16.mxu0 0
        %1277 = vmatpush1.bf16.msra.mxu0 0
        %1278 = vmatprep.subr.bf16.mxu0 0
        %1279 = vmatpush1.bf16.msra.mxu0 0
        %1280 = vmatprep.subr.bf16.mxu0 0
        %1281 = vmatpush1.bf16.msra.mxu0 0
        %1282 = vmatprep.subr.bf16.mxu0 0
        %1283 = vmatpush1.bf16.msra.mxu0 0
        %1284 = vmatprep.subr.bf16.mxu0 0
        %1285 = vmatpush1.bf16.msra.mxu0 0
        %1286 = vmatprep.subr.bf16.mxu0 0
        %1287 = vmatpush1.bf16.msra.mxu0 0
        %1288 = vmatprep.subr.bf16.mxu0 0
        %1289 = vmatpush1.bf16.msra.mxu0 0
        %1290 = vmatprep.subr.bf16.mxu0 0
        %1291 = vmatpush1.bf16.msra.mxu0 0
        %1292 = vmatprep.subr.bf16.mxu0 0
        %1293 = vmatpush1.bf16.msra.mxu0 0
        %1294 = vmatprep.subr.bf16.mxu0 0
        %1295 = vmatpush1.bf16.msra.mxu0 0
        %1296 = vmatprep.subr.bf16.mxu0 0
        %1297 = vmatpush1.bf16.msra.mxu0 0
        %1298 = vmatprep.subr.bf16.mxu0 0
        %1299 = vmatpush1.bf16.msra.mxu0 0
        %1300 = vmatprep.mubr.bf16.mxu0 0
        %1301 = vmatmul.mubr.bf16.gmra.mrb[0].mxu0 %v1238
        %v1302 = vpop.f32.mrb[0].mxu0
        %v1303 = vadd.f32 %v1204, %v1302
        %v1304 = vpop.f32.mrb[0].mxu0
        %v1305 = vadd.f32 %v1208, %v1304
        %v1306 = vpop.f32.mrb[0].mxu0
        %v1307 = vadd.f32 %v1204, %v1306
        %v1308 = vpop.f32.mrb[0].mxu0
        %v1309 = vadd.f32 %v1208, %v1308
        %1310 = vmatprep.mubr.bf16.mxu0 0
        %1311 = vmatmul.mubr.bf16.gmra.mrb[0].mxu0 %v1241
        %v1312 = vpop.f32.mrb[0].mxu0
        %v1313 = vadd.f32 %v1204, %v1312
        %v1314 = vpop.f32.mrb[0].mxu0
        %v1315 = vadd.f32 %v1208, %v1314
        %v1316 = vpop.f32.mrb[0].mxu0
        %v1317 = vadd.f32 %v1204, %v1316
        %v1318 = vpop.f32.mrb[0].mxu0
        %v1319 = vadd.f32 %v1208, %v1318
        %1320 = vmatprep.mubr.bf16.mxu0 0
        %1321 = vmatmul.mubr.bf16.gmra.mrb[0].mxu0 %v1244
        %v1322 = vpop.f32.mrb[0].mxu0
        %v1323 = vadd.f32 %v1204, %v1322
        %v1324 = vpop.f32.mrb[0].mxu0
        %v1325 = vadd.f32 %v1208, %v1324
        %v1326 = vpop.f32.mrb[0].mxu0
        %v1327 = vadd.f32 %v1204, %v1326
        %v1328 = vpop.f32.mrb[0].mxu0
        %v1329 = vadd.f32 %v1208, %v1328
        %1330 = vmatprep.mubr.bf16.mxu0 0
        %1331 = vmatmul.mubr.bf16.gmra.mrb[0].mxu0 %v1247
        %v1332 = vpop.f32.mrb[0].mxu0
        %v1333 = vadd.f32 %v1204, %v1332
        %v1334 = vpop.f32.mrb[0].mxu0
        %v1335 = vadd.f32 %v1208, %v1334
        %v1336 = vpop.f32.mrb[0].mxu0
        %v1337 = vadd.f32 %v1204, %v1336
        %v1338 = vpop.f32.mrb[0].mxu0
        %v1339 = vadd.f32 %v1208, %v1338
        %1340 = vmatprep.mubr.bf16.mxu0 0
        %1341 = vmatmul.mubr.bf16.gmra.mrb[0].mxu0 %v1250
        %v1342 = vpop.f32.mrb[0].mxu0
        %v1343 = vadd.f32 %v1204, %v1342
        %v1344 = vpop.f32.mrb[0].mxu0
        %v1345 = vadd.f32 %v1208, %v1344
        %v1346 = vpop.f32.mrb[0].mxu0
        %v1347 = vadd.f32 %v1204, %v1346
        %v1348 = vpop.f32.mrb[0].mxu0
        %v1349 = vadd.f32 %v1208, %v1348
        %1350 = vmatprep.mubr.bf16.mxu0 0
        %1351 = vmatmul.mubr.bf16.gmra.mrb[0].mxu0 %v1253
        %v1352 = vpop.f32.mrb[0].mxu0
        %v1353 = vadd.f32 %v1204, %v1352
        %v1354 = vpop.f32.mrb[0].mxu0
        %v1355 = vadd.f32 %v1208, %v1354
        %v1356 = vpop.f32.mrb[0].mxu0
        %v1357 = vadd.f32 %v1204, %v1356
        %v1358 = vpop.f32.mrb[0].mxu0
        %v1359 = vadd.f32 %v1208, %v1358
        %1360 = vmatprep.mubr.bf16.mxu0 0
        %1361 = vmatmul.mubr.bf16.gmra.mrb[0].mxu0 %v1256
        %v1362 = vpop.f32.mrb[0].mxu0
        %v1363 = vadd.f32 %v1204, %v1362
        %v1364 = vpop.f32.mrb[0].mxu0
        %v1365 = vadd.f32 %v1208, %v1364
        %v1366 = vpop.f32.mrb[0].mxu0
        %v1367 = vadd.f32 %v1204, %v1366
        %v1368 = vpop.f32.mrb[0].mxu0
        %v1369 = vadd.f32 %v1208, %v1368
        %1370 = vmatprep.mubr.bf16.mxu0 0
        %1371 = vmatmul.mubr.bf16.gmra.mrb[0].mxu0 %v1259
        %v1372 = vpop.f32.mrb[0].mxu0
        %v1373 = vadd.f32 %v1204, %v1372
        %v1374 = vpop.f32.mrb[0].mxu0
        %v1375 = vadd.f32 %v1208, %v1374
        %v1376 = vpop.f32.mrb[0].mxu0
        %v1377 = vadd.f32 %v1204, %v1376
        %v1378 = vpop.f32.mrb[0].mxu0
        %v1379 = vadd.f32 %v1208, %v1378
        %1380 = vdwg.mxu0
        %s1381 = sld [smem:[#allocation3]]
        %vm1382 = vcmp.gt.f32.partialorder %v1303, 0.0
        %vm1383 = vcmp.gt.f32.partialorder %v1305, 0.0
        %vm1384 = vcmp.gt.f32.partialorder %v1307, 0.0
        %vm1385 = vcmp.gt.f32.partialorder %v1309, 0.0
        %vm1386 = vcmp.gt.f32.partialorder %v1313, 0.0
        %vm1387 = vcmp.gt.f32.partialorder %v1315, 0.0
        %vm1388 = vcmp.gt.f32.partialorder %v1317, 0.0
        %vm1389 = vcmp.gt.f32.partialorder %v1319, 0.0
        %vm1390 = vcmp.gt.f32.partialorder %v1323, 0.0
        %vm1391 = vcmp.gt.f32.partialorder %v1325, 0.0
        %vm1392 = vcmp.gt.f32.partialorder %v1327, 0.0
        %vm1393 = vcmp.gt.f32.partialorder %v1329, 0.0
        %vm1394 = vcmp.gt.f32.partialorder %v1333, 0.0
        %vm1395 = vcmp.gt.f32.partialorder %v1335, 0.0
        %vm1396 = vcmp.gt.f32.partialorder %v1337, 0.0
        %vm1397 = vcmp.gt.f32.partialorder %v1339, 0.0
        %vm1398 = vcmp.gt.f32.partialorder %v1343, 0.0
        %vm1399 = vcmp.gt.f32.partialorder %v1345, 0.0
        %vm1400 = vcmp.gt.f32.partialorder %v1347, 0.0
        %vm1401 = vcmp.gt.f32.partialorder %v1349, 0.0
        %vm1402 = vcmp.gt.f32.partialorder %v1353, 0.0
        %vm1403 = vcmp.gt.f32.partialorder %v1355, 0.0
        %vm1404 = vcmp.gt.f32.partialorder %v1357, 0.0
        %vm1405 = vcmp.gt.f32.partialorder %v1359, 0.0
        %vm1406 = vcmp.gt.f32.partialorder %v1363, 0.0
        %vm1407 = vcmp.gt.f32.partialorder %v1365, 0.0
        %vm1408 = vcmp.gt.f32.partialorder %v1367, 0.0
        %vm1409 = vcmp.gt.f32.partialorder %v1369, 0.0
        %vm1410 = vcmp.gt.f32.partialorder %v1373, 0.0
        %vm1411 = vcmp.gt.f32.partialorder %v1375, 0.0
        %vm1412 = vcmp.gt.f32.partialorder %v1377, 0.0
        %vm1413 = vcmp.gt.f32.partialorder %v1379, 0.0
        %v1414 = vstv %s1381
        %v1415 = vmul.f32 %v1414, %v1303
        %v1416 = vmul.f32 %v1414, %v1305
        %v1417 = vmul.f32 %v1414, %v1307
        %v1418 = vmul.f32 %v1414, %v1309
        %v1419 = vmul.f32 %v1414, %v1313
        %v1420 = vmul.f32 %v1414, %v1315
        %v1421 = vmul.f32 %v1414, %v1317
        %v1422 = vmul.f32 %v1414, %v1319
        %v1423 = vmul.f32 %v1414, %v1323
        %v1424 = vmul.f32 %v1414, %v1325
        %v1425 = vmul.f32 %v1414, %v1327
        %v1426 = vmul.f32 %v1414, %v1329
        %v1427 = vmul.f32 %v1414, %v1333
        %v1428 = vmul.f32 %v1414, %v1335
        %v1429 = vmul.f32 %v1414, %v1337
        %v1430 = vmul.f32 %v1414, %v1339
        %v1431 = vmul.f32 %v1414, %v1343
        %v1432 = vmul.f32 %v1414, %v1345
        %v1433 = vmul.f32 %v1414, %v1347
        %v1434 = vmul.f32 %v1414, %v1349
        %v1435 = vmul.f32 %v1414, %v1353
        %v1436 = vmul.f32 %v1414, %v1355
        %v1437 = vmul.f32 %v1414, %v1357
        %v1438 = vmul.f32 %v1414, %v1359
        %v1439 = vmul.f32 %v1414, %v1363
        %v1440 = vmul.f32 %v1414, %v1365
        %v1441 = vmul.f32 %v1414, %v1367
        %v1442 = vmul.f32 %v1414, %v1369
        %v1443 = vmul.f32 %v1414, %v1373
        %v1444 = vmul.f32 %v1414, %v1375
        %v1445 = vmul.f32 %v1414, %v1377
        %v1446 = vmul.f32 %v1414, %v1379
        %v1447 = vsel %vm1382, %v1303, %v1415
        %v1448 = vsel %vm1383, %v1305, %v1416
        %v1449 = vsel %vm1384, %v1307, %v1417
        %v1450 = vsel %vm1385, %v1309, %v1418
        %v1451 = vsel %vm1386, %v1313, %v1419
        %v1452 = vsel %vm1387, %v1315, %v1420
        %v1453 = vsel %vm1388, %v1317, %v1421
        %v1454 = vsel %vm1389, %v1319, %v1422
        %v1455 = vsel %vm1390, %v1323, %v1423
        %v1456 = vsel %vm1391, %v1325, %v1424
        %v1457 = vsel %vm1392, %v1327, %v1425
        %v1458 = vsel %vm1393, %v1329, %v1426
        %v1459 = vsel %vm1394, %v1333, %v1427
        %v1460 = vsel %vm1395, %v1335, %v1428
        %v1461 = vsel %vm1396, %v1337, %v1429
        %v1462 = vsel %vm1397, %v1339, %v1430
        %v1463 = vsel %vm1398, %v1343, %v1431
        %v1464 = vsel %vm1399, %v1345, %v1432
        %v1465 = vsel %vm1400, %v1347, %v1433
        %v1466 = vsel %vm1401, %v1349, %v1434
        %v1467 = vsel %vm1402, %v1353, %v1435
        %v1468 = vsel %vm1403, %v1355, %v1436
        %v1469 = vsel %vm1404, %v1357, %v1437
        %v1470 = vsel %vm1405, %v1359, %v1438
        %v1471 = vsel %vm1406, %v1363, %v1439
        %v1472 = vsel %vm1407, %v1365, %v1440
        %v1473 = vsel %vm1408, %v1367, %v1441
        %v1474 = vsel %vm1409, %v1369, %v1442
        %v1475 = vsel %vm1410, %v1373, %v1443
        %v1476 = vsel %vm1411, %v1375, %v1444
        %v1477 = vsel %vm1412, %v1377, %v1445
        %v1478 = vsel %vm1413, %v1379, %v1446
        %v1479 = vpack.c.bf16 %v1449, %v1447
        %v1480 = vpack.c.bf16 %v1450, %v1448
        %v1481 = vpack.c.bf16 %v1453, %v1451
        %v1482 = vpack.c.bf16 %v1454, %v1452
        %v1483 = vpack.c.bf16 %v1457, %v1455
        %v1484 = vpack.c.bf16 %v1458, %v1456
        %v1485 = vpack.c.bf16 %v1461, %v1459
        %v1486 = vpack.c.bf16 %v1462, %v1460
        %v1487 = vpack.c.bf16 %v1465, %v1463
        %v1488 = vpack.c.bf16 %v1466, %v1464
        %v1489 = vpack.c.bf16 %v1469, %v1467
        %v1490 = vpack.c.bf16 %v1470, %v1468
        %v1491 = vpack.c.bf16 %v1473, %v1471
        %v1492 = vpack.c.bf16 %v1474, %v1472
        %v1493 = vpack.c.bf16 %v1477, %v1475
        %v1494 = vpack.c.bf16 %v1478, %v1476
        %v1511 = vunpack.c.l.b16 %v1479
        %v1512 = vunpack.c.l.b16 %v1480
        %v1513 = vunpack.c.h.b16 %v1479
        %v1514 = vunpack.c.h.b16 %v1480
        %v1515 = vunpack.c.l.b16 %v1481
        %v1516 = vunpack.c.l.b16 %v1482
        %v1517 = vunpack.c.h.b16 %v1481
        %v1518 = vunpack.c.h.b16 %v1482
        %v1519 = vunpack.c.l.b16 %v1483
        %v1520 = vunpack.c.l.b16 %v1484
        %v1521 = vunpack.c.h.b16 %v1483
        %v1522 = vunpack.c.h.b16 %v1484
        %v1523 = vunpack.c.l.b16 %v1485
        %v1524 = vunpack.c.l.b16 %v1486
        %v1525 = vunpack.c.h.b16 %v1485
        %v1526 = vunpack.c.h.b16 %v1486
        %v1527 = vunpack.c.l.b16 %v1487
        %v1528 = vunpack.c.l.b16 %v1488
        %v1529 = vunpack.c.h.b16 %v1487
        %v1530 = vunpack.c.h.b16 %v1488
        %v1531 = vunpack.c.l.b16 %v1489
        %v1532 = vunpack.c.l.b16 %v1490
        %v1533 = vunpack.c.h.b16 %v1489
        %v1534 = vunpack.c.h.b16 %v1490
        %v1535 = vunpack.c.l.b16 %v1491
        %v1536 = vunpack.c.l.b16 %v1492
        %v1537 = vunpack.c.h.b16 %v1491
        %v1538 = vunpack.c.h.b16 %v1492
        %v1539 = vunpack.c.l.b16 %v1493
        %v1540 = vunpack.c.l.b16 %v1494
        %v1541 = vunpack.c.h.b16 %v1493
        %v1542 = vunpack.c.h.b16 %v1494
        %v1543 = vpack.c.b16 %v1512, %v1511
        %v1544 = vpack.c.b16 %v1514, %v1513
        %v1545 = vpack.c.b16 %v1516, %v1515
        %v1546 = vpack.c.b16 %v1518, %v1517
        %v1547 = vpack.c.b16 %v1520, %v1519
        %v1548 = vpack.c.b16 %v1522, %v1521
        %v1549 = vpack.c.b16 %v1524, %v1523
        %v1550 = vpack.c.b16 %v1526, %v1525
        %v1551 = vpack.c.b16 %v1528, %v1527
        %v1552 = vpack.c.b16 %v1530, %v1529
        %v1553 = vpack.c.b16 %v1532, %v1531
        %v1554 = vpack.c.b16 %v1534, %v1533
        %v1555 = vpack.c.b16 %v1536, %v1535
        %v1556 = vpack.c.b16 %v1538, %v1537
        %v1557 = vpack.c.b16 %v1540, %v1539
        %v1558 = vpack.c.b16 %v1542, %v1541
        %1575 = vst [vmem:[%s235] sm:$0xff] %v1543
        %1576 = vst [vmem:[%s235 + $0x8] sm:$0xff] %v1544
        %1577 = vst [vmem:[%s235 + $0x10] sm:$0xff] %v1545
        %1578 = vst [vmem:[%s235 + $0x18] sm:$0xff] %v1546
        %1579 = vst [vmem:[%s235 + $0x20] sm:$0xff] %v1547
        %1580 = vst [vmem:[%s235 + $0x28] sm:$0xff] %v1548
        %1581 = vst [vmem:[%s235 + $0x30] sm:$0xff] %v1549
        %1582 = vst [vmem:[%s235 + $0x38] sm:$0xff] %v1550
        %1583 = vst [vmem:[%s235 + $0x40] sm:$0xff] %v1551
        %1584 = vst [vmem:[%s235 + $0x48] sm:$0xff] %v1552
        %1585 = vst [vmem:[%s235 + $0x50] sm:$0xff] %v1553
        %1586 = vst [vmem:[%s235 + $0x58] sm:$0xff] %v1554
        %1587 = vst [vmem:[%s235 + $0x60] sm:$0xff] %v1555
        %1588 = vst [vmem:[%s235 + $0x68] sm:$0xff] %v1556
        %1589 = vst [vmem:[%s235 + $0x70] sm:$0xff] %v1557
        %1590 = vst [vmem:[%s235 + $0x78] sm:$0xff] %v1558
        %s1591 = smul.u32 16, %s22
        %p1592 = scmp.lt.s32.totalorder %s21, 1
        %s1593 = scalar_select %p1592, %s21, 1
        %p1594 = scmp.lt.s32.totalorder %s1591, 31
        %s1595 = scalar_select %p1594, %s1591, 31
        %s1596 = smul.addr %s1595, 2
        %s1597 = smul.addr %s1593, 64
        %s1598 = sadd.s32 %s1596, %s1597
        %s1599 = smul.addr %s1598, 4
        %s1600 = scalar_lea.vmem %s4, %s1599
        // Predicated region
        $region41: #{upsampling_block.1} parent=35 // pred_check
          %p1601 = pneg %p138
        $region42: #{upsampling_block.1} parent=35 // pred_check_branch
          %1603 = sbr.rel (%p1601) target = $region44
        $region43: #{upsampling_block.1} parent=35 // pred_region
          %s1604 = smul.u32 16, %s22
        $region44: #{upsampling_block.1} parent=35 // pred_fallthru
          _
      $region36: #{upsampling_block.1} parent=5 // pred_fallthru
        _
      %p1605 = scmp.le.s32.totalorder 2, %s12
      // Predicated region
      $region45: #{upsampling_block.1} parent=5 // pred_check
        %p1606 = pneg %p1605
      $region46: #{upsampling_block.1} parent=5 // pred_check_branch
        %1608 = sbr.rel (%p1606) target = $region48
      $region47: #{upsampling_block.1} parent=5 // pred_region
        %s1609 = ssub.s32 %s12, 2
        // Predicated region
        $region49: #{upsampling_block.1} parent=47 // pred_check
          %p1610 = pneg %p144
        $region50: #{upsampling_block.1} parent=47 // pred_check_branch
          %1612 = sbr.rel (%p1610) target = $region52
        $region51: #{upsampling_block.1} parent=47 // pred_region
          %s1613 = smul.u32 16, %s24
          %p1614 = scmp.lt.s32.totalorder %s23, 1
          %s1615 = scalar_select %p1614, %s23, 1
          %p1616 = scmp.lt.s32.totalorder %s1613, 31
          %s1617 = scalar_select %p1616, %s1613, 31
          %s1618 = smul.addr %s1617, 2
          %s1619 = smul.addr %s1615, 64
          %s1620 = sadd.s32 %s1618, %s1619
          %s1621 = smul.addr %s1620, 4
          %s1622 = scalar_lea.vmem %s4, %s1621
        $region52: #{upsampling_block.1} parent=47 // pred_fallthru
          _
      $region48: #{upsampling_block.1} parent=5 // pred_fallthru
        _
    $region6: #{upsampling_block.1} parent=1 // loop_footer
      %s16 = sadd.s32 1, %s12
    $region7: #{upsampling_block.1} parent=1 // loop_footer_branch
      %11 = sbr.rel target = $region3
    $region8: #{upsampling_block.1} parent=1 // loop_exit
      _
    %1623 = vsyncpa [#allocation5], 1
    %s1624 = scalar_lea.sflag [#allocation5], 1
    %1625 = vsyncpa %s1624, 1

</llo_original>
